<compile_context>
chip_gen: v7x
topology: tpu7x:2x2x1
jax: 0.10.0
libtpu: 0.0.40
codegen_flags: <defaults>
</compile_context>

<pallas_src>
import functools

import jax
import jax.numpy as jnp
from jax import lax
from jax.experimental import pallas as pl
from jax.experimental.pallas import tpu as pltpu


# ----------------------------------------------------------------------------
# Kernels
# ----------------------------------------------------------------------------
def _conv_stats_kernel(x_ref, scale_ref, shift_ref, w_ref,
                       y_ref, ysum_ref, ysq_ref, xpad_ref,
                       *, H, W, Cin, apply_relu):
    """One image per grid step.

    x_ref     : (1, H, W*Cin)            incoming activation (lane-dense slab)
    scale_ref : (1, W*Cin) f32           per-channel affine (tiled across W)
    shift_ref : (1, W*Cin) f32
    w_ref     : (3, (W+2)*Cin, W*Cout)   banded conv weight (bf16)
    y_ref     : (1, H, W*Cout) f32       raw conv output (pre-BN), lane-dense
    ysum_ref  : (1, 1, W*Cout) f32       per-image column sums (BN partials)
    ysq_ref   : (1, 1, W*Cout) f32       per-image column sums of squares
    xpad_ref  : (H+2, (W+2)*Cin) f32     VMEM scratch: zero-halo padded input
    """
    # Fused affine (+ optional ReLU) on the incoming activation.  For stage 2
    # this *is* BatchNorm1 + ReLU1 folded into the conv-2 input path.
    xin = x_ref[0].astype(jnp.float32) * scale_ref[...] + shift_ref[...]
    if apply_relu:
        xin = jnp.maximum(xin, 0.0)

    # Build the 1-pixel zero halo inside VMEM (no HBM-side jnp.pad).
    xpad_ref[...] = jnp.zeros_like(xpad_ref)
    xpad_ref[1:H + 1, Cin:(W + 1) * Cin] = xin.astype(xpad_ref.dtype)

    # 3 MXU matmuls (one per dy tap row) against the banded weight.  Each lhs
    # slice is a contiguous leading-dim window; output lands directly in the
    # lane-dense (H, W*Cout) layout (no per-tap slices, no relayouts).
    acc = jnp.dot(xpad_ref[0:H, :].astype(w_ref.dtype), w_ref[0],
                  preferred_element_type=jnp.float32)
    acc = acc + jnp.dot(xpad_ref[1:H + 1, :].astype(w_ref.dtype), w_ref[1],
                        preferred_element_type=jnp.float32)
    acc = acc + jnp.dot(xpad_ref[2:H + 2, :].astype(w_ref.dtype), w_ref[2],
                        preferred_element_type=jnp.float32)
    # NOTE: the conv bias is intentionally absent — training-mode BN cancels it.

    # Per-image partial BN statistics (folded per-channel outside the kernel,
    # so the batch statistics stay global even though the grid is parallel).
    ysum_ref[0] = jnp.sum(acc, axis=0, keepdims=True)
    ysq_ref[0] = jnp.sum(acc * acc, axis=0, keepdims=True)

    # Lane-dense (unmasked) store of the raw conv output.
    y_ref[0] = acc.astype(y_ref.dtype)


def _affine_relu_kernel(x_ref, scale_ref, shift_ref, o_ref):
    """y = max(x * scale + shift, 0) on a lane-dense (H, W*C) slab."""
    y = x_ref[0].astype(jnp.float32) * scale_ref[...] + shift_ref[...]
    o_ref[0] = jnp.maximum(y, 0.0).astype(o_ref.dtype)


# ----------------------------------------------------------------------------
# pallas_call wrappers
# ----------------------------------------------------------------------------
def _conv_and_stats(x, scale_w, shift_w, w_banded, *, H, W, Cin, Cout, apply_relu):
    N = x.shape[0]
    wc_out = W * Cout
    kern = functools.partial(_conv_stats_kernel, H=H, W=W, Cin=Cin,
                             apply_relu=apply_relu)
    flops = int(2 * N * 3 * H * ((W + 2) * Cin) * wc_out)
    bytes_accessed = int(x.size * x.dtype.itemsize
                         + w_banded.size * w_banded.dtype.itemsize
                         + (scale_w.size + shift_w.size) * 4
                         + N * H * wc_out * 4 + 2 * N * wc_out * 4)
    y, ysum, ysq = pl.pallas_call(
        kern,
        out_shape=(jax.ShapeDtypeStruct((N, H, wc_out), jnp.float32),
                   jax.ShapeDtypeStruct((N, 1, wc_out), jnp.float32),
                   jax.ShapeDtypeStruct((N, 1, wc_out), jnp.float32)),
        grid=(N,),
        in_specs=[
            pl.BlockSpec((1, H, W * Cin), lambda n: (n, 0, 0)),
            pl.BlockSpec((1, W * Cin), lambda n: (0, 0)),
            pl.BlockSpec((1, W * Cin), lambda n: (0, 0)),
            pl.BlockSpec((3, (W + 2) * Cin, wc_out), lambda n: (0, 0, 0)),
        ],
        out_specs=(
            pl.BlockSpec((1, H, wc_out), lambda n: (n, 0, 0)),
            pl.BlockSpec((1, 1, wc_out), lambda n: (n, 0, 0)),
            pl.BlockSpec((1, 1, wc_out), lambda n: (n, 0, 0)),
        ),
        scratch_shapes=[pltpu.VMEM((H + 2, (W + 2) * Cin), jnp.float32)],
        compiler_params=pltpu.CompilerParams(
            dimension_semantics=("parallel",),
            vmem_limit_bytes=32 * 1024 * 1024),
        cost_estimate=pl.CostEstimate(flops=flops, transcendentals=0,
                                      bytes_accessed=bytes_accessed),
    )(x, scale_w, shift_w, w_banded)
    return y, ysum, ysq


def _affine_relu(x, scale_w, shift_w):
    N, H, WC = x.shape
    return pl.pallas_call(
        _affine_relu_kernel,
        out_shape=jax.ShapeDtypeStruct((N, H, WC), jnp.float32),
        grid=(N,),
        in_specs=[pl.BlockSpec((1, H, WC), lambda n: (n, 0, 0)),
                  pl.BlockSpec((1, WC), lambda n: (0, 0)),
                  pl.BlockSpec((1, WC), lambda n: (0, 0))],
        out_specs=pl.BlockSpec((1, H, WC), lambda n: (n, 0, 0)),
        compiler_params=pltpu.CompilerParams(
            dimension_semantics=("parallel",),
            vmem_limit_bytes=32 * 1024 * 1024),
    )(x, scale_w, shift_w)


# ----------------------------------------------------------------------------
# Host-side helpers (plain JAX, tiny)
# ----------------------------------------------------------------------------
def _pack_banded_weight(w_hwio, W):
    """(3,3,Cin,Cout) -> (3, (W+2)*Cin, W*Cout) banded matmul weight.

    B[dy, (w+dx)*Cin + c, w*Cout + o] = w_hwio[dy, dx, c, o], zero elsewhere,
    so a padded input row (length (W+2)*Cin, channel-fastest) matmul'd with
    B[dy] yields the dy-tap contribution for every (w, out-channel) directly
    in the lane-dense W*Cout layout.  (Small-W / small-C specialization; at
    real UNet channel counts a channel-packed im2col weight is the better fit.)
    """
    kh, kw, cin, cout = w_hwio.shape
    blk = w_hwio.reshape(kh, kw * cin, cout)           # rows ordered (dx, cin)
    B = jnp.zeros((kh, (W + 2) * cin, W * cout), w_hwio.dtype)
    for w in range(W):
        B = B.at[:, w * cin:(w + kw) * cin, w * cout:(w + 1) * cout].set(blk)
    return B


def _tile_channels(v, W):
    """Per-channel (C,) vector -> lane-dense (1, W*C) matching the slab layout."""
    return jnp.tile(v.astype(jnp.float32), W).reshape(1, -1)


def _bn_scale_shift(ysum, ysq, gamma, beta, *, n, h, w, cout, eps=1e-5):
    """Fold per-image column partials into a per-channel BN (scale, shift)."""
    count = n * h * w
    s = jnp.sum(ysum.reshape(n, w, cout), axis=(0, 1))
    q = jnp.sum(ysq.reshape(n, w, cout), axis=(0, 1))
    mean = s / count
    var = jnp.maximum(q / count - mean * mean, 0.0)    # biased, training-mode BN
    scale = gamma * lax.rsqrt(var + eps)
    shift = beta - mean * scale
    return scale, shift


# ----------------------------------------------------------------------------
# Parameters + forward
# ----------------------------------------------------------------------------
def init_params(key, in_channel, out_channel):
    """PyTorch-style init (kaiming-uniform conv; BN gamma=1, beta=0)."""
    k1, k2, k3, k4 = jax.random.split(key, 4)

    def conv_init(kw, kb, cin, cout):
        bound = 1.0 / jnp.sqrt(cin * 3 * 3)
        w = jax.random.uniform(kw, (3, 3, cin, cout), jnp.float32, -bound, bound)
        b = jax.random.uniform(kb, (cout,), jnp.float32, -bound, bound)
        return w, b

    w1, b1 = conv_init(k1, k2, in_channel, out_channel)
    w2, b2 = conv_init(k3, k4, out_channel, out_channel)
    return dict(w1=w1, b1=b1, bn1_g=jnp.ones((out_channel,), jnp.float32),
                bn1_b=jnp.zeros((out_channel,), jnp.float32),
                w2=w2, b2=b2, bn2_g=jnp.ones((out_channel,), jnp.float32),
                bn2_b=jnp.zeros((out_channel,), jnp.float32))


def in_conv_forward(x_nchw, params, *, compute_dtype=jnp.bfloat16):
    """InConv forward.  NCHW in, NCHW out.  Training-mode (batch-stat) BN."""
    N, Cin, H, W = x_nchw.shape
    Cout = params["w1"].shape[-1]

    # NCHW -> NHWC -> lane-dense (N, H, W*Cin) slab; bf16 MXU operands.
    x = jnp.transpose(x_nchw, (0, 2, 3, 1)).reshape(N, H, W * Cin)
    x = x.astype(compute_dtype)

    w1 = _pack_banded_weight(params["w1"], W).astype(compute_dtype)
    w2 = _pack_banded_weight(params["w2"], W).astype(compute_dtype)

    one_in = _tile_channels(jnp.ones((Cin,), jnp.float32), W)
    zero_in = jnp.zeros_like(one_in)

    # Stage 1: conv1 + per-image BN1 partials (conv bias omitted: BN cancels it).
    y1, s1, q1 = _conv_and_stats(x, one_in, zero_in, w1,
                                 H=H, W=W, Cin=Cin, Cout=Cout, apply_relu=False)
    sc1, sh1 = _bn_scale_shift(s1, q1, params["bn1_g"], params["bn1_b"],
                               n=N, h=H, w=W, cout=Cout)

    # Stage 2: BN1 + ReLU fused into the conv-2 input path; conv2 + BN2 partials.
    y2, s2, q2 = _conv_and_stats(y1, _tile_channels(sc1, W),
                                 _tile_channels(sh1, W), w2,
                                 H=H, W=W, Cin=Cout, Cout=Cout, apply_relu=True)
    sc2, sh2 = _bn_scale_shift(s2, q2, params["bn2_g"], params["bn2_b"],
                               n=N, h=H, w=W, cout=Cout)

    # Stage 3: BN2 + ReLU epilogue (lane-dense elementwise kernel).
    out = _affine_relu(y2, _tile_channels(sc2, W), _tile_channels(sh2, W))

    out = out.reshape(N, H, W, Cout)
    return jnp.transpose(out, (0, 3, 1, 2))


# ----------------------------------------------------------------------------
# Pure-JAX references (sanity checks only)
# ----------------------------------------------------------------------------
def _ref_conv_bn_relu(x_nhwc, w, b, g, beta, operand_dtype):
    xq = x_nhwc.astype(operand_dtype).astype(jnp.float32)
    wq = w.astype(operand_dtype).astype(jnp.float32)
    y = lax.conv_general_dilated(
        xq, wq, window_strides=(1, 1), padding="SAME",
        dimension_numbers=("NHWC", "HWIO", "NHWC")) + b
    mean = jnp.mean(y, axis=(0, 1, 2), keepdims=True)
    var = jnp.mean(jnp.square(y - mean), axis=(0, 1, 2), keepdims=True)
    return jnp.maximum((y - mean) * lax.rsqrt(var + 1e-5) * g + beta, 0.0)


def _ref_forward(x_nchw, p, operand_dtype):
    x = jnp.transpose(x_nchw, (0, 2, 3, 1)).astype(jnp.float32)
    x = _ref_conv_bn_relu(x, p["w1"], p["b1"], p["bn1_g"], p["bn1_b"], operand_dtype)
    x = _ref_conv_bn_relu(x, p["w2"], p["b2"], p["bn2_g"], p["bn2_b"], operand_dtype)
    return jnp.transpose(x, (0, 3, 1, 2))


if __name__ == "__main__":
    key = jax.random.PRNGKey(0)
    kx, kp = jax.random.split(key)

    N, Cin, Cout, H, W = 2, 4, 8, 16, 16          # W*Cout = 128 -> lane-dense
    x = jax.random.normal(kx, (N, Cin, H, W), jnp.float32)   # NCHW like PyTorch
    params = init_params(kp, Cin, Cout)

    fwd = jax.jit(in_conv_forward)
    out = jax.block_until_ready(fwd(x, params))
    assert out.shape == (N, Cout, H, W)

    # Check vs. a reference that rounds the matmul operands to bf16 the same
    # way the kernel does (tight), and vs. the pure-f32 PyTorch-semantics
    # reference (loose tolerance accounts only for the bf16 MXU operands).
    ref_bf16 = jax.block_until_ready(_ref_forward(x, params, jnp.bfloat16))
    ref_f32 = jax.block_until_ready(_ref_forward(x, params, jnp.float32))
    assert jnp.allclose(out, ref_bf16, rtol=2e-3, atol=2e-3), "mismatch vs bf16 ref"
    assert jnp.allclose(out, ref_f32, rtol=5e-2, atol=5e-2), "mismatch vs f32 ref"

    print("KERNEL_OK")
</pallas_src>

<mosaic_0001>
module attributes {stable_mosaic.version = 11 : i64} {
  func.func @_conv_stats_kernel(%arg0: i32, %arg1: memref<1x16x64xbf16, #tpu.memory_space<vmem>>, %arg2: memref<1x64xf32, #tpu.memory_space<vmem>>, %arg3: memref<1x64xf32, #tpu.memory_space<vmem>>, %arg4: memref<3x72x128xbf16, #tpu.memory_space<vmem>>, %arg5: memref<1x16x128xf32, #tpu.memory_space<vmem>>, %arg6: memref<1x1x128xf32, #tpu.memory_space<vmem>>, %arg7: memref<1x1x128xf32, #tpu.memory_space<vmem>>, %arg8: memref<18x72xf32, #tpu.memory_space<vmem>>) attributes {dimension_semantics = [#tpu.dimension_semantics<parallel>], iteration_bounds = array<i64: 2>, scalar_prefetch = 0 : i64, scratch_operands = 1 : i64, tpu.core_type = #tpu.core_type<tc>, window_params = [{transform_indices = @transform_0, window_bounds = array<i64: 1, 16, 64>}, {pipeline_mode = #tpu.pipeline_mode<synchronous>, transform_indices = @transform_1, window_bounds = array<i64: 1, 64>}, {pipeline_mode = #tpu.pipeline_mode<synchronous>, transform_indices = @transform_2, window_bounds = array<i64: 1, 64>}, {pipeline_mode = #tpu.pipeline_mode<synchronous>, transform_indices = @transform_3, window_bounds = array<i64: 3, 72, 128>}, {transform_indices = @transform_4, window_bounds = array<i64: 1, 16, 128>}, {transform_indices = @transform_5, window_bounds = array<i64: 1, 1, 128>}, {transform_indices = @transform_6, window_bounds = array<i64: 1, 1, 128>}]} {
    %c0 = arith.constant 0 : index
    %c0_0 = arith.constant 0 : index
    %c0_1 = arith.constant 0 : index
    %0 = vector.load %arg1[%c0, %c0_0, %c0_1] : memref<1x16x64xbf16, #tpu.memory_space<vmem>>, vector<1x16x64xbf16>
    %1 = vector.shape_cast %0 : vector<1x16x64xbf16> to vector<16x64xbf16>
    %2 = arith.extf %1 : vector<16x64xbf16> to vector<16x64xf32>
    %c0_2 = arith.constant 0 : index
    %c0_3 = arith.constant 0 : index
    %3 = vector.load %arg2[%c0_2, %c0_3] : memref<1x64xf32, #tpu.memory_space<vmem>>, vector<1x64xf32>
    %4 = vector.broadcast %3 : vector<1x64xf32> to vector<16x64xf32>
    %5 = arith.mulf %2, %4 : vector<16x64xf32>
    %c0_4 = arith.constant 0 : index
    %c0_5 = arith.constant 0 : index
    %6 = vector.load %arg3[%c0_4, %c0_5] : memref<1x64xf32, #tpu.memory_space<vmem>>, vector<1x64xf32>
    %7 = vector.broadcast %6 : vector<1x64xf32> to vector<16x64xf32>
    %8 = arith.addf %5, %7 : vector<16x64xf32>
    %cst = arith.constant 0.000000e+00 : f32
    %9 = vector.broadcast %cst : f32 to vector<18x72xf32>
    %c0_6 = arith.constant 0 : index
    %c0_7 = arith.constant 0 : index
    %10 = vector.load %arg8[%c0_6, %c0_7] : memref<18x72xf32, #tpu.memory_space<vmem>>, vector<18x72xf32>
    tpu.vector_store %arg8[%c0_6, %c0_7], %9 {strides = array<i32>} : memref<18x72xf32, #tpu.memory_space<vmem>>, vector<18x72xf32>,
    %c1 = arith.constant 1 : index
    %c4 = arith.constant 4 : index
    %11 = vector.load %arg8[%c1, %c4] : memref<18x72xf32, #tpu.memory_space<vmem>>, vector<16x64xf32>
    tpu.vector_store %arg8[%c1, %c4], %8 {strides = array<i32>} : memref<18x72xf32, #tpu.memory_space<vmem>>, vector<16x64xf32>,
    %c0_8 = arith.constant 0 : index
    %c0_9 = arith.constant 0 : index
    %12 = vector.load %arg8[%c0_8, %c0_9] : memref<18x72xf32, #tpu.memory_space<vmem>>, vector<16x72xf32>
    %13 = arith.truncf %12 : vector<16x72xf32> to vector<16x72xbf16>
    %c0_10 = arith.constant 0 : index
    %c0_11 = arith.constant 0 : index
    %c0_12 = arith.constant 0 : index
    %14 = vector.load %arg4[%c0_10, %c0_11, %c0_12] : memref<3x72x128xbf16, #tpu.memory_space<vmem>>, vector<1x72x128xbf16>
    %15 = vector.shape_cast %14 : vector<1x72x128xbf16> to vector<72x128xbf16>
    %cst_13 = arith.constant dense<0.000000e+00> : vector<16x128xf32>
    %16 = tpu.matmul %13, %15, %cst_13 {dimension_numbers = #tpu.dot_dimension_numbers<[1], [0], [0], [1], [0, 0, 1, 1], [], []>} : vector<16x72xbf16>, vector<72x128xbf16>, vector<16x128xf32> -> vector<16x128xf32>
    %c1_14 = arith.constant 1 : index
    %c0_15 = arith.constant 0 : index
    %17 = vector.load %arg8[%c1_14, %c0_15] : memref<18x72xf32, #tpu.memory_space<vmem>>, vector<16x72xf32>
    %18 = arith.truncf %17 : vector<16x72xf32> to vector<16x72xbf16>
    %c1_16 = arith.constant 1 : index
    %c0_17 = arith.constant 0 : index
    %c0_18 = arith.constant 0 : index
    %19 = vector.load %arg4[%c1_16, %c0_17, %c0_18] : memref<3x72x128xbf16, #tpu.memory_space<vmem>>, vector<1x72x128xbf16>
    %20 = vector.shape_cast %19 : vector<1x72x128xbf16> to vector<72x128xbf16>
    %cst_19 = arith.constant dense<0.000000e+00> : vector<16x128xf32>
    %21 = tpu.matmul %18, %20, %cst_19 {dimension_numbers = #tpu.dot_dimension_numbers<[1], [0], [0], [1], [0, 0, 1, 1], [], []>} : vector<16x72xbf16>, vector<72x128xbf16>, vector<16x128xf32> -> vector<16x128xf32>
    %22 = arith.addf %16, %21 : vector<16x128xf32>
    %c2 = arith.constant 2 : index
    %c0_20 = arith.constant 0 : index
    %23 = vector.load %arg8[%c2, %c0_20] : memref<18x72xf32, #tpu.memory_space<vmem>>, vector<16x72xf32>
    %24 = arith.truncf %23 : vector<16x72xf32> to vector<16x72xbf16>
    %c2_21 = arith.constant 2 : index
    %c0_22 = arith.constant 0 : index
    %c0_23 = arith.constant 0 : index
    %25 = vector.load %arg4[%c2_21, %c0_22, %c0_23] : memref<3x72x128xbf16, #tpu.memory_space<vmem>>, vector<1x72x128xbf16>
    %26 = vector.shape_cast %25 : vector<1x72x128xbf16> to vector<72x128xbf16>
    %cst_24 = arith.constant dense<0.000000e+00> : vector<16x128xf32>
    %27 = tpu.matmul %24, %26, %cst_24 {dimension_numbers = #tpu.dot_dimension_numbers<[1], [0], [0], [1], [0, 0, 1, 1], [], []>} : vector<16x72xbf16>, vector<72x128xbf16>, vector<16x128xf32> -> vector<16x128xf32>
    %28 = arith.addf %22, %27 : vector<16x128xf32>
    %cst_25 = arith.constant dense<0.000000e+00> : vector<128xf32>
    %29 = vector.multi_reduction <add>, %28, %cst_25 [0] : vector<16x128xf32> to vector<128xf32>
    %30 = vector.shape_cast %29 : vector<128xf32> to vector<1x128xf32>
    %c0_26 = arith.constant 0 : index
    %c0_27 = arith.constant 0 : index
    %c0_28 = arith.constant 0 : index
    %31 = vector.load %arg6[%c0_26, %c0_27, %c0_28] : memref<1x1x128xf32, #tpu.memory_space<vmem>>, vector<1x1x128xf32>
    %32 = vector.shape_cast %31 : vector<1x1x128xf32> to vector<1x128xf32>
    %33 = vector.shape_cast %30 : vector<1x128xf32> to vector<1x1x128xf32>
    tpu.vector_store %arg6[%c0_26, %c0_27, %c0_28], %33 {strides = array<i32>} : memref<1x1x128xf32, #tpu.memory_space<vmem>>, vector<1x1x128xf32>,
    %34 = arith.mulf %28, %28 : vector<16x128xf32>
    %cst_29 = arith.constant dense<0.000000e+00> : vector<128xf32>
    %35 = vector.multi_reduction <add>, %34, %cst_29 [0] : vector<16x128xf32> to vector<128xf32>
    %36 = vector.shape_cast %35 : vector<128xf32> to vector<1x128xf32>
    %c0_30 = arith.constant 0 : index
    %c0_31 = arith.constant 0 : index
    %c0_32 = arith.constant 0 : index
    %37 = vector.load %arg7[%c0_30, %c0_31, %c0_32] : memref<1x1x128xf32, #tpu.memory_space<vmem>>, vector<1x1x128xf32>
    %38 = vector.shape_cast %37 : vector<1x1x128xf32> to vector<1x128xf32>
    %39 = vector.shape_cast %36 : vector<1x128xf32> to vector<1x1x128xf32>
    tpu.vector_store %arg7[%c0_30, %c0_31, %c0_32], %39 {strides = array<i32>} : memref<1x1x128xf32, #tpu.memory_space<vmem>>, vector<1x1x128xf32>,
    %c0_33 = arith.constant 0 : index
    %c0_34 = arith.constant 0 : index
    %c0_35 = arith.constant 0 : index
    %40 = vector.load %arg5[%c0_33, %c0_34, %c0_35] : memref<1x16x128xf32, #tpu.memory_space<vmem>>, vector<1x16x128xf32>
    %41 = vector.shape_cast %40 : vector<1x16x128xf32> to vector<16x128xf32>
    %42 = vector.shape_cast %28 : vector<16x128xf32> to vector<1x16x128xf32>
    tpu.vector_store %arg5[%c0_33, %c0_34, %c0_35], %42 {strides = array<i32>} : memref<1x16x128xf32, #tpu.memory_space<vmem>>, vector<1x16x128xf32>,
    return
  }
  func.func @transform_0(%arg0: i32) -> (i32, i32, i32) {
    %c0_i32 = arith.constant 0 : i32
    %c0_i32_0 = arith.constant 0 : i32
    %c0_i32_1 = arith.constant 0 : i32
    return %arg0, %c0_i32, %c0_i32_0 : i32, i32, i32
  }
  func.func @transform_1(%arg0: i32) -> (i32, i32) {
    %c0_i32 = arith.constant 0 : i32
    %c0_i32_0 = arith.constant 0 : i32
    %c0_i32_1 = arith.constant 0 : i32
    return %c0_i32, %c0_i32_0 : i32, i32
  }
  func.func @transform_2(%arg0: i32) -> (i32, i32) {
    %c0_i32 = arith.constant 0 : i32
    %c0_i32_0 = arith.constant 0 : i32
    %c0_i32_1 = arith.constant 0 : i32
    return %c0_i32, %c0_i32_0 : i32, i32
  }
  func.func @transform_3(%arg0: i32) -> (i32, i32, i32) {
    %c0_i32 = arith.constant 0 : i32
    %c0_i32_0 = arith.constant 0 : i32
    %c0_i32_1 = arith.constant 0 : i32
    %c0_i32_2 = arith.constant 0 : i32
    return %c0_i32, %c0_i32_0, %c0_i32_1 : i32, i32, i32
  }
  func.func @transform_4(%arg0: i32) -> (i32, i32, i32) {
    %c0_i32 = arith.constant 0 : i32
    %c0_i32_0 = arith.constant 0 : i32
    %c0_i32_1 = arith.constant 0 : i32
    return %arg0, %c0_i32, %c0_i32_0 : i32, i32, i32
  }
  func.func @transform_5(%arg0: i32) -> (i32, i32, i32) {
    %c0_i32 = arith.constant 0 : i32
    %c0_i32_0 = arith.constant 0 : i32
    %c0_i32_1 = arith.constant 0 : i32
    return %arg0, %c0_i32, %c0_i32_0 : i32, i32, i32
  }
  func.func @transform_6(%arg0: i32) -> (i32, i32, i32) {
    %c0_i32 = arith.constant 0 : i32
    %c0_i32_0 = arith.constant 0 : i32
    %c0_i32_1 = arith.constant 0 : i32
    return %arg0, %c0_i32, %c0_i32_0 : i32, i32, i32
  }
}

module attributes {stable_mosaic.version = 11 : i64} {
  func.func @_conv_stats_kernel(%arg0: i32, %arg1: memref<1x16x128xf32, #tpu.memory_space<vmem>>, %arg2: memref<1x128xf32, #tpu.memory_space<vmem>>, %arg3: memref<1x128xf32, #tpu.memory_space<vmem>>, %arg4: memref<3x144x128xbf16, #tpu.memory_space<vmem>>, %arg5: memref<1x16x128xf32, #tpu.memory_space<vmem>>, %arg6: memref<1x1x128xf32, #tpu.memory_space<vmem>>, %arg7: memref<1x1x128xf32, #tpu.memory_space<vmem>>, %arg8: memref<18x144xf32, #tpu.memory_space<vmem>>) attributes {dimension_semantics = [#tpu.dimension_semantics<parallel>], iteration_bounds = array<i64: 2>, scalar_prefetch = 0 : i64, scratch_operands = 1 : i64, tpu.core_type = #tpu.core_type<tc>, window_params = [{transform_indices = @transform_0, window_bounds = array<i64: 1, 16, 128>}, {pipeline_mode = #tpu.pipeline_mode<synchronous>, transform_indices = @transform_1, window_bounds = array<i64: 1, 128>}, {pipeline_mode = #tpu.pipeline_mode<synchronous>, transform_indices = @transform_2, window_bounds = array<i64: 1, 128>}, {pipeline_mode = #tpu.pipeline_mode<synchronous>, transform_indices = @transform_3, window_bounds = array<i64: 3, 144, 128>}, {transform_indices = @transform_4, window_bounds = array<i64: 1, 16, 128>}, {transform_indices = @transform_5, window_bounds = array<i64: 1, 1, 128>}, {transform_indices = @transform_6, window_bounds = array<i64: 1, 1, 128>}]} {
    %c0 = arith.constant 0 : index
    %c0_0 = arith.constant 0 : index
    %c0_1 = arith.constant 0 : index
    %0 = vector.load %arg1[%c0, %c0_0, %c0_1] : memref<1x16x128xf32, #tpu.memory_space<vmem>>, vector<1x16x128xf32>
    %1 = vector.shape_cast %0 : vector<1x16x128xf32> to vector<16x128xf32>
    %c0_2 = arith.constant 0 : index
    %c0_3 = arith.constant 0 : index
    %2 = vector.load %arg2[%c0_2, %c0_3] : memref<1x128xf32, #tpu.memory_space<vmem>>, vector<1x128xf32>
    %3 = vector.broadcast %2 : vector<1x128xf32> to vector<16x128xf32>
    %4 = arith.mulf %1, %3 : vector<16x128xf32>
    %c0_4 = arith.constant 0 : index
    %c0_5 = arith.constant 0 : index
    %5 = vector.load %arg3[%c0_4, %c0_5] : memref<1x128xf32, #tpu.memory_space<vmem>>, vector<1x128xf32>
    %6 = vector.broadcast %5 : vector<1x128xf32> to vector<16x128xf32>
    %7 = arith.addf %4, %6 : vector<16x128xf32>
    %cst = arith.constant 0.000000e+00 : f32
    %8 = vector.broadcast %cst : f32 to vector<16x128xf32>
    %9 = arith.maximumf %7, %8 : vector<16x128xf32>
    %cst_6 = arith.constant 0.000000e+00 : f32
    %10 = vector.broadcast %cst_6 : f32 to vector<18x144xf32>
    %c0_7 = arith.constant 0 : index
    %c0_8 = arith.constant 0 : index
    %11 = vector.load %arg8[%c0_7, %c0_8] : memref<18x144xf32, #tpu.memory_space<vmem>>, vector<18x144xf32>
    tpu.vector_store %arg8[%c0_7, %c0_8], %10 {strides = array<i32>} : memref<18x144xf32, #tpu.memory_space<vmem>>, vector<18x144xf32>,
    %c1 = arith.constant 1 : index
    %c8 = arith.constant 8 : index
    %12 = vector.load %arg8[%c1, %c8] : memref<18x144xf32, #tpu.memory_space<vmem>>, vector<16x128xf32>
    tpu.vector_store %arg8[%c1, %c8], %9 {strides = array<i32>} : memref<18x144xf32, #tpu.memory_space<vmem>>, vector<16x128xf32>,
    %c0_9 = arith.constant 0 : index
    %c0_10 = arith.constant 0 : index
    %13 = vector.load %arg8[%c0_9, %c0_10] : memref<18x144xf32, #tpu.memory_space<vmem>>, vector<16x144xf32>
    %14 = arith.truncf %13 : vector<16x144xf32> to vector<16x144xbf16>
    %c0_11 = arith.constant 0 : index
    %c0_12 = arith.constant 0 : index
    %c0_13 = arith.constant 0 : index
    %15 = vector.load %arg4[%c0_11, %c0_12, %c0_13] : memref<3x144x128xbf16, #tpu.memory_space<vmem>>, vector<1x144x128xbf16>
    %16 = vector.shape_cast %15 : vector<1x144x128xbf16> to vector<144x128xbf16>
    %cst_14 = arith.constant dense<0.000000e+00> : vector<16x128xf32>
    %17 = tpu.matmul %14, %16, %cst_14 {dimension_numbers = #tpu.dot_dimension_numbers<[1], [0], [0], [1], [0, 0, 1, 1], [], []>} : vector<16x144xbf16>, vector<144x128xbf16>, vector<16x128xf32> -> vector<16x128xf32>
    %c1_15 = arith.constant 1 : index
    %c0_16 = arith.constant 0 : index
    %18 = vector.load %arg8[%c1_15, %c0_16] : memref<18x144xf32, #tpu.memory_space<vmem>>, vector<16x144xf32>
    %19 = arith.truncf %18 : vector<16x144xf32> to vector<16x144xbf16>
    %c1_17 = arith.constant 1 : index
    %c0_18 = arith.constant 0 : index
    %c0_19 = arith.constant 0 : index
    %20 = vector.load %arg4[%c1_17, %c0_18, %c0_19] : memref<3x144x128xbf16, #tpu.memory_space<vmem>>, vector<1x144x128xbf16>
    %21 = vector.shape_cast %20 : vector<1x144x128xbf16> to vector<144x128xbf16>
    %cst_20 = arith.constant dense<0.000000e+00> : vector<16x128xf32>
    %22 = tpu.matmul %19, %21, %cst_20 {dimension_numbers = #tpu.dot_dimension_numbers<[1], [0], [0], [1], [0, 0, 1, 1], [], []>} : vector<16x144xbf16>, vector<144x128xbf16>, vector<16x128xf32> -> vector<16x128xf32>
    %23 = arith.addf %17, %22 : vector<16x128xf32>
    %c2 = arith.constant 2 : index
    %c0_21 = arith.constant 0 : index
    %24 = vector.load %arg8[%c2, %c0_21] : memref<18x144xf32, #tpu.memory_space<vmem>>, vector<16x144xf32>
    %25 = arith.truncf %24 : vector<16x144xf32> to vector<16x144xbf16>
    %c2_22 = arith.constant 2 : index
    %c0_23 = arith.constant 0 : index
    %c0_24 = arith.constant 0 : index
    %26 = vector.load %arg4[%c2_22, %c0_23, %c0_24] : memref<3x144x128xbf16, #tpu.memory_space<vmem>>, vector<1x144x128xbf16>
    %27 = vector.shape_cast %26 : vector<1x144x128xbf16> to vector<144x128xbf16>
    %cst_25 = arith.constant dense<0.000000e+00> : vector<16x128xf32>
    %28 = tpu.matmul %25, %27, %cst_25 {dimension_numbers = #tpu.dot_dimension_numbers<[1], [0], [0], [1], [0, 0, 1, 1], [], []>} : vector<16x144xbf16>, vector<144x128xbf16>, vector<16x128xf32> -> vector<16x128xf32>
    %29 = arith.addf %23, %28 : vector<16x128xf32>
    %cst_26 = arith.constant dense<0.000000e+00> : vector<128xf32>
    %30 = vector.multi_reduction <add>, %29, %cst_26 [0] : vector<16x128xf32> to vector<128xf32>
    %31 = vector.shape_cast %30 : vector<128xf32> to vector<1x128xf32>
    %c0_27 = arith.constant 0 : index
    %c0_28 = arith.constant 0 : index
    %c0_29 = arith.constant 0 : index
    %32 = vector.load %arg6[%c0_27, %c0_28, %c0_29] : memref<1x1x128xf32, #tpu.memory_space<vmem>>, vector<1x1x128xf32>
    %33 = vector.shape_cast %32 : vector<1x1x128xf32> to vector<1x128xf32>
    %34 = vector.shape_cast %31 : vector<1x128xf32> to vector<1x1x128xf32>
    tpu.vector_store %arg6[%c0_27, %c0_28, %c0_29], %34 {strides = array<i32>} : memref<1x1x128xf32, #tpu.memory_space<vmem>>, vector<1x1x128xf32>,
    %35 = arith.mulf %29, %29 : vector<16x128xf32>
    %cst_30 = arith.constant dense<0.000000e+00> : vector<128xf32>
    %36 = vector.multi_reduction <add>, %35, %cst_30 [0] : vector<16x128xf32> to vector<128xf32>
    %37 = vector.shape_cast %36 : vector<128xf32> to vector<1x128xf32>
    %c0_31 = arith.constant 0 : index
    %c0_32 = arith.constant 0 : index
    %c0_33 = arith.constant 0 : index
    %38 = vector.load %arg7[%c0_31, %c0_32, %c0_33] : memref<1x1x128xf32, #tpu.memory_space<vmem>>, vector<1x1x128xf32>
    %39 = vector.shape_cast %38 : vector<1x1x128xf32> to vector<1x128xf32>
    %40 = vector.shape_cast %37 : vector<1x128xf32> to vector<1x1x128xf32>
    tpu.vector_store %arg7[%c0_31, %c0_32, %c0_33], %40 {strides = array<i32>} : memref<1x1x128xf32, #tpu.memory_space<vmem>>, vector<1x1x128xf32>,
    %c0_34 = arith.constant 0 : index
    %c0_35 = arith.constant 0 : index
    %c0_36 = arith.constant 0 : index
    %41 = vector.load %arg5[%c0_34, %c0_35, %c0_36] : memref<1x16x128xf32, #tpu.memory_space<vmem>>, vector<1x16x128xf32>
    %42 = vector.shape_cast %41 : vector<1x16x128xf32> to vector<16x128xf32>
    %43 = vector.shape_cast %29 : vector<16x128xf32> to vector<1x16x128xf32>
    tpu.vector_store %arg5[%c0_34, %c0_35, %c0_36], %43 {strides = array<i32>} : memref<1x16x128xf32, #tpu.memory_space<vmem>>, vector<1x16x128xf32>,
    return
  }
  func.func @transform_0(%arg0: i32) -> (i32, i32, i32) {
    %c0_i32 = arith.constant 0 : i32
    %c0_i32_0 = arith.constant 0 : i32
    %c0_i32_1 = arith.constant 0 : i32
    return %arg0, %c0_i32, %c0_i32_0 : i32, i32, i32
  }
  func.func @transform_1(%arg0: i32) -> (i32, i32) {
    %c0_i32 = arith.constant 0 : i32
    %c0_i32_0 = arith.constant 0 : i32
    %c0_i32_1 = arith.constant 0 : i32
    return %c0_i32, %c0_i32_0 : i32, i32
  }
  func.func @transform_2(%arg0: i32) -> (i32, i32) {
    %c0_i32 = arith.constant 0 : i32
    %c0_i32_0 = arith.constant 0 : i32
    %c0_i32_1 = arith.constant 0 : i32
    return %c0_i32, %c0_i32_0 : i32, i32
  }
  func.func @transform_3(%arg0: i32) -> (i32, i32, i32) {
    %c0_i32 = arith.constant 0 : i32
    %c0_i32_0 = arith.constant 0 : i32
    %c0_i32_1 = arith.constant 0 : i32
    %c0_i32_2 = arith.constant 0 : i32
    return %c0_i32, %c0_i32_0, %c0_i32_1 : i32, i32, i32
  }
  func.func @transform_4(%arg0: i32) -> (i32, i32, i32) {
    %c0_i32 = arith.constant 0 : i32
    %c0_i32_0 = arith.constant 0 : i32
    %c0_i32_1 = arith.constant 0 : i32
    return %arg0, %c0_i32, %c0_i32_0 : i32, i32, i32
  }
  func.func @transform_5(%arg0: i32) -> (i32, i32, i32) {
    %c0_i32 = arith.constant 0 : i32
    %c0_i32_0 = arith.constant 0 : i32
    %c0_i32_1 = arith.constant 0 : i32
    return %arg0, %c0_i32, %c0_i32_0 : i32, i32, i32
  }
  func.func @transform_6(%arg0: i32) -> (i32, i32, i32) {
    %c0_i32 = arith.constant 0 : i32
    %c0_i32_0 = arith.constant 0 : i32
    %c0_i32_1 = arith.constant 0 : i32
    return %arg0, %c0_i32, %c0_i32_0 : i32, i32, i32
  }
}

module attributes {stable_mosaic.version = 11 : i64} {
  func.func @_affine_relu_kernel(%arg0: i32, %arg1: memref<1x16x128xf32, #tpu.memory_space<vmem>>, %arg2: memref<1x128xf32, #tpu.memory_space<vmem>>, %arg3: memref<1x128xf32, #tpu.memory_space<vmem>>, %arg4: memref<1x16x128xf32, #tpu.memory_space<vmem>>) attributes {dimension_semantics = [#tpu.dimension_semantics<parallel>], iteration_bounds = array<i64: 2>, scalar_prefetch = 0 : i64, scratch_operands = 0 : i64, tpu.core_type = #tpu.core_type<tc>, window_params = [{transform_indices = @transform_0, window_bounds = array<i64: 1, 16, 128>}, {pipeline_mode = #tpu.pipeline_mode<synchronous>, transform_indices = @transform_1, window_bounds = array<i64: 1, 128>}, {pipeline_mode = #tpu.pipeline_mode<synchronous>, transform_indices = @transform_2, window_bounds = array<i64: 1, 128>}, {transform_indices = @transform_3, window_bounds = array<i64: 1, 16, 128>}]} {
    %c0 = arith.constant 0 : index
    %c0_0 = arith.constant 0 : index
    %c0_1 = arith.constant 0 : index
    %0 = vector.load %arg1[%c0, %c0_0, %c0_1] : memref<1x16x128xf32, #tpu.memory_space<vmem>>, vector<1x16x128xf32>
    %1 = vector.shape_cast %0 : vector<1x16x128xf32> to vector<16x128xf32>
    %c0_2 = arith.constant 0 : index
    %c0_3 = arith.constant 0 : index
    %2 = vector.load %arg2[%c0_2, %c0_3] : memref<1x128xf32, #tpu.memory_space<vmem>>, vector<1x128xf32>
    %3 = vector.broadcast %2 : vector<1x128xf32> to vector<16x128xf32>
    %4 = arith.mulf %1, %3 : vector<16x128xf32>
    %c0_4 = arith.constant 0 : index
    %c0_5 = arith.constant 0 : index
    %5 = vector.load %arg3[%c0_4, %c0_5] : memref<1x128xf32, #tpu.memory_space<vmem>>, vector<1x128xf32>
    %6 = vector.broadcast %5 : vector<1x128xf32> to vector<16x128xf32>
    %7 = arith.addf %4, %6 : vector<16x128xf32>
    %cst = arith.constant 0.000000e+00 : f32
    %8 = vector.broadcast %cst : f32 to vector<16x128xf32>
    %9 = arith.maximumf %7, %8 : vector<16x128xf32>
    %c0_6 = arith.constant 0 : index
    %c0_7 = arith.constant 0 : index
    %c0_8 = arith.constant 0 : index
    %10 = vector.load %arg4[%c0_6, %c0_7, %c0_8] : memref<1x16x128xf32, #tpu.memory_space<vmem>>, vector<1x16x128xf32>
    %11 = vector.shape_cast %10 : vector<1x16x128xf32> to vector<16x128xf32>
    %12 = vector.shape_cast %9 : vector<16x128xf32> to vector<1x16x128xf32>
    tpu.vector_store %arg4[%c0_6, %c0_7, %c0_8], %12 {strides = array<i32>} : memref<1x16x128xf32, #tpu.memory_space<vmem>>, vector<1x16x128xf32>,
    return
  }
  func.func @transform_0(%arg0: i32) -> (i32, i32, i32) {
    %c0_i32 = arith.constant 0 : i32
    %c0_i32_0 = arith.constant 0 : i32
    %c0_i32_1 = arith.constant 0 : i32
    return %arg0, %c0_i32, %c0_i32_0 : i32, i32, i32
  }
  func.func @transform_1(%arg0: i32) -> (i32, i32) {
    %c0_i32 = arith.constant 0 : i32
    %c0_i32_0 = arith.constant 0 : i32
    %c0_i32_1 = arith.constant 0 : i32
    return %c0_i32, %c0_i32_0 : i32, i32
  }
  func.func @transform_2(%arg0: i32) -> (i32, i32) {
    %c0_i32 = arith.constant 0 : i32
    %c0_i32_0 = arith.constant 0 : i32
    %c0_i32_1 = arith.constant 0 : i32
    return %c0_i32, %c0_i32_0 : i32, i32
  }
  func.func @transform_3(%arg0: i32) -> (i32, i32, i32) {
    %c0_i32 = arith.constant 0 : i32
    %c0_i32_0 = arith.constant 0 : i32
    %c0_i32_1 = arith.constant 0 : i32
    return %arg0, %c0_i32, %c0_i32_0 : i32, i32, i32
  }
}

</mosaic_0001>

<llo_original>
// kernel: in_conv_forward.3
$region0: #{in_conv_forward.3}
  #allocation0 [shape = 'u32[]', space=smem, size = 0x4, offset = 0x4, fixed_abs, tag = 'smem constant byte address 0x4 - core index']
  #allocation1 [shape = 'u32[144,128]{1,0:T(1,128)}', space=vmem, size = 0x12000, scoped, tag = 'internal scratch']
  #allocation2 [shape = 'f32[18,72]{1,0:T(8,128)}', space=vmem, size = 0x3000, scoped, tag = 'scratch operand']
  %s0 = inlined_call_operand.vmem [shape: bf16[2,16,64], index: 0, kind: input, shape index: {}]
  %s1 = inlined_call_operand.vmem [shape: f32[1,64], index: 1, kind: input, shape index: {}]
  %s2 = inlined_call_operand.vmem [shape: f32[1,64], index: 2, kind: input, shape index: {}]
  %s3 = inlined_call_operand.vmem [shape: bf16[3,72,128], index: 3, kind: input, shape index: {}]
  %s4 = inlined_call_operand.vmem [shape: f32[2,16,128], index: 4, kind: output, shape index: {0}]
  %s5 = inlined_call_operand.vmem [shape: f32[2,1,128], index: 5, kind: output, shape index: {1}]
  %s6 = inlined_call_operand.vmem [shape: f32[2,1,128], index: 6, kind: output, shape index: {2}]
  %7 = xla_tuple %s4, %s5, %s6
  %s8 = sld [smem:[#allocation0]]
  $region65: #{in_conv_forward.3} parent=0
    _
  %s10 = ssub.s32 1, %s8
  %s11 = scalar_select 0, %s10, %s8
  loop: start=0, step=1, limit=4
  $region2: #{in_conv_forward.3} parent=0 // loop_pre_header
    _
  $region3: #{in_conv_forward.3} parent=0 // loop_header
    %s13 = sphi 0, %s17
    %p14 = scmp.ge.s32.totalorder %s13, 4
    %s23 = sphi 0, %s25
    %s26 = sphi 0, %s23
    %s27 = sphi 0, %s26
    %s43 = sphi 0, %s27
    %s47 = sphi 0, %s47
    %s49 = sphi 0, %s47
    %s50 = sphi 0, %s49
    %s64 = sphi 0, %s50
    %s68 = sphi 0, %s68
    %s70 = sphi 0, %s68
    %s71 = sphi 0, %s70
    %s85 = sphi 0, %s71
    %s89 = sphi 0, %s89
    %s91 = sphi 0, %s89
    %s92 = sphi 0, %s91
    %s106 = sphi 0, %s92
    %s112 = sphi 0, %s114
    %s115 = sphi 0, %s112
    %s116 = sphi 0, %s115
    %s132 = sphi 0, %s116
    %s138 = sphi 0, %s140
    %s141 = sphi 0, %s138
    %s142 = sphi 0, %s141
    %s158 = sphi 0, %s142
    %s164 = sphi 0, %s166
    %s167 = sphi 0, %s164
    %s168 = sphi 0, %s167
    %s184 = sphi 0, %s168
  $region4: #{in_conv_forward.3} parent=0 // loop_header_branch
    %16 = sbr.rel (%p14) target = $region8
  $region5: #{in_conv_forward.3} parent=0 // loop_body
    %s18 = ssub.s32 %s13, 1
    %s19 = ssub.s32 %s13, 2
    %s20 = sadd.s32 %s13, 1
    %s21 = ssub.s32 %s13, %s20
    %p22 = scmp.eq.s32.totalorder %s21, 0
    %s24 = sadd.s32 %s23, 1
    %s25 = scalar_select %p22, %s23, %s24
    %p28 = pneg %p22
    %p29 = scmp.eq.s32.totalorder %s13, 1
    %p30 = por %p28, %p29
    %p31 = scmp.ne.s32.totalorder %s23, %s26
    %p32 = scmp.eq.s32.totalorder %s13, 0
    %p33 = por %p31, %p32
    %p34 = scmp.ne.s32.totalorder %s23, %s26
    %p35 = scmp.eq.s32.totalorder %s18, 1
    %p36 = por %p34, %p35
    %p37 = scmp.ne.s32.totalorder %s26, %s27
    %p38 = scmp.eq.s32.totalorder %s18, 0
    %p39 = por %p37, %p38
    %p40 = scmp.ne.s32.totalorder %s26, %s27
    %p41 = scmp.eq.s32.totalorder %s19, 1
    %p42 = por %p40, %p41
    %p44 = scmp.ne.s32.totalorder %s27, %s43
    %p45 = scmp.eq.s32.totalorder %s19, 0
    %p46 = por %p44, %p45
    %s48 = sadd.s32 %s47, 1
    %p51 = scmp.eq.s32.totalorder %s13, 1
    %p52 = scmp.ne.s32.totalorder %s47, %s49
    %p53 = scmp.eq.s32.totalorder %s13, 0
    %p54 = por %p52, %p53
    %p55 = scmp.ne.s32.totalorder %s47, %s49
    %p56 = scmp.eq.s32.totalorder %s18, 1
    %p57 = por %p55, %p56
    %p58 = scmp.ne.s32.totalorder %s49, %s50
    %p59 = scmp.eq.s32.totalorder %s18, 0
    %p60 = por %p58, %p59
    %p61 = scmp.ne.s32.totalorder %s49, %s50
    %p62 = scmp.eq.s32.totalorder %s19, 1
    %p63 = por %p61, %p62
    %p65 = scmp.ne.s32.totalorder %s50, %s64
    %p66 = scmp.eq.s32.totalorder %s19, 0
    %p67 = por %p65, %p66
    %s69 = sadd.s32 %s68, 1
    %p72 = scmp.eq.s32.totalorder %s13, 1
    %p73 = scmp.ne.s32.totalorder %s68, %s70
    %p74 = scmp.eq.s32.totalorder %s13, 0
    %p75 = por %p73, %p74
    %p76 = scmp.ne.s32.totalorder %s68, %s70
    %p77 = scmp.eq.s32.totalorder %s18, 1
    %p78 = por %p76, %p77
    %p79 = scmp.ne.s32.totalorder %s70, %s71
    %p80 = scmp.eq.s32.totalorder %s18, 0
    %p81 = por %p79, %p80
    %p82 = scmp.ne.s32.totalorder %s70, %s71
    %p83 = scmp.eq.s32.totalorder %s19, 1
    %p84 = por %p82, %p83
    %p86 = scmp.ne.s32.totalorder %s71, %s85
    %p87 = scmp.eq.s32.totalorder %s19, 0
    %p88 = por %p86, %p87
    %s90 = sadd.s32 %s89, 1
    %p93 = scmp.eq.s32.totalorder %s13, 1
    %p94 = scmp.ne.s32.totalorder %s89, %s91
    %p95 = scmp.eq.s32.totalorder %s13, 0
    %p96 = por %p94, %p95
    %p97 = scmp.ne.s32.totalorder %s89, %s91
    %p98 = scmp.eq.s32.totalorder %s18, 1
    %p99 = por %p97, %p98
    %p100 = scmp.ne.s32.totalorder %s91, %s92
    %p101 = scmp.eq.s32.totalorder %s18, 0
    %p102 = por %p100, %p101
    %p103 = scmp.ne.s32.totalorder %s91, %s92
    %p104 = scmp.eq.s32.totalorder %s19, 1
    %p105 = por %p103, %p104
    %p107 = scmp.ne.s32.totalorder %s92, %s106
    %p108 = scmp.eq.s32.totalorder %s19, 0
    %p109 = por %p107, %p108
    %s110 = ssub.s32 %s13, %s20
    %p111 = scmp.eq.s32.totalorder %s110, 0
    %s113 = sadd.s32 %s112, 1
    %s114 = scalar_select %p111, %s112, %s113
    %p117 = pneg %p111
    %p118 = scmp.eq.s32.totalorder %s13, 1
    %p119 = por %p117, %p118
    %p120 = scmp.ne.s32.totalorder %s112, %s115
    %p121 = scmp.eq.s32.totalorder %s13, 0
    %p122 = por %p120, %p121
    %p123 = scmp.ne.s32.totalorder %s112, %s115
    %p124 = scmp.eq.s32.totalorder %s18, 1
    %p125 = por %p123, %p124
    %p126 = scmp.ne.s32.totalorder %s115, %s116
    %p127 = scmp.eq.s32.totalorder %s18, 0
    %p128 = por %p126, %p127
    %p129 = scmp.ne.s32.totalorder %s115, %s116
    %p130 = scmp.eq.s32.totalorder %s19, 1
    %p131 = por %p129, %p130
    %p133 = scmp.ne.s32.totalorder %s116, %s132
    %p134 = scmp.eq.s32.totalorder %s19, 0
    %p135 = por %p133, %p134
    %s136 = ssub.s32 %s13, %s20
    %p137 = scmp.eq.s32.totalorder %s136, 0
    %s139 = sadd.s32 %s138, 1
    %s140 = scalar_select %p137, %s138, %s139
    %p143 = pneg %p137
    %p144 = scmp.eq.s32.totalorder %s13, 1
    %p145 = por %p143, %p144
    %p146 = scmp.ne.s32.totalorder %s138, %s141
    %p147 = scmp.eq.s32.totalorder %s13, 0
    %p148 = por %p146, %p147
    %p149 = scmp.ne.s32.totalorder %s138, %s141
    %p150 = scmp.eq.s32.totalorder %s18, 1
    %p151 = por %p149, %p150
    %p152 = scmp.ne.s32.totalorder %s141, %s142
    %p153 = scmp.eq.s32.totalorder %s18, 0
    %p154 = por %p152, %p153
    %p155 = scmp.ne.s32.totalorder %s141, %s142
    %p156 = scmp.eq.s32.totalorder %s19, 1
    %p157 = por %p155, %p156
    %p159 = scmp.ne.s32.totalorder %s142, %s158
    %p160 = scmp.eq.s32.totalorder %s19, 0
    %p161 = por %p159, %p160
    %s162 = ssub.s32 %s13, %s20
    %p163 = scmp.eq.s32.totalorder %s162, 0
    %s165 = sadd.s32 %s164, 1
    %s166 = scalar_select %p163, %s164, %s165
    %p169 = pneg %p163
    %p170 = scmp.eq.s32.totalorder %s13, 1
    %p171 = por %p169, %p170
    %p172 = scmp.ne.s32.totalorder %s164, %s167
    %p173 = scmp.eq.s32.totalorder %s13, 0
    %p174 = por %p172, %p173
    %p175 = scmp.ne.s32.totalorder %s164, %s167
    %p176 = scmp.eq.s32.totalorder %s18, 1
    %p177 = por %p175, %p176
    %p178 = scmp.ne.s32.totalorder %s167, %s168
    %p179 = scmp.eq.s32.totalorder %s18, 0
    %p180 = por %p178, %p179
    %p181 = scmp.ne.s32.totalorder %s167, %s168
    %p182 = scmp.eq.s32.totalorder %s19, 1
    %p183 = por %p181, %p182
    %p185 = scmp.ne.s32.totalorder %s168, %s184
    %p186 = scmp.eq.s32.totalorder %s19, 0
    %p187 = por %p185, %p186
    %p188 = scmp.le.s32.totalorder 1, %s13
    %p189 = scmp.lt.s32.totalorder %s13, 3
    %p190 = pnand %p188, %p189
    %p191 = pneg %p190
    // Predicated region
    $region9: #{in_conv_forward.3} parent=5 // pred_check
      _
    $region10: #{in_conv_forward.3} parent=5 // pred_check_branch
      %193 = sbr.rel (%p190) target = $region12
    $region11: #{in_conv_forward.3} parent=5 // pred_region
      %s194 = ssub.s32 %s13, 1
      // Predicated region
      $region13: #{in_conv_forward.3} parent=11 // pred_check
        %p195 = pneg %p60
      $region14: #{in_conv_forward.3} parent=11 // pred_check_branch
        %197 = sbr.rel (%p195) target = $region16
      $region15: #{in_conv_forward.3} parent=11 // pred_region
        _
      $region16: #{in_conv_forward.3} parent=11 // pred_fallthru
        _
      // Predicated region
      $region17: #{in_conv_forward.3} parent=11 // pred_check
        %p198 = pneg %p81
      $region18: #{in_conv_forward.3} parent=11 // pred_check_branch
        %200 = sbr.rel (%p198) target = $region20
      $region19: #{in_conv_forward.3} parent=11 // pred_region
        _
      $region20: #{in_conv_forward.3} parent=11 // pred_fallthru
        _
      // Predicated region
      $region21: #{in_conv_forward.3} parent=11 // pred_check
        %p201 = pneg %p102
      $region22: #{in_conv_forward.3} parent=11 // pred_check_branch
        %203 = sbr.rel (%p201) target = $region24
      $region23: #{in_conv_forward.3} parent=11 // pred_region
        _
      $region24: #{in_conv_forward.3} parent=11 // pred_fallthru
        _
    $region12: #{in_conv_forward.3} parent=5 // pred_fallthru
      _
    %p204 = scmp.lt.s32.totalorder %s13, 2
    // Predicated region
    $region25: #{in_conv_forward.3} parent=5 // pred_check
      %p205 = pneg %p204
    $region26: #{in_conv_forward.3} parent=5 // pred_check_branch
      %207 = sbr.rel (%p205) target = $region28
    $region27: #{in_conv_forward.3} parent=5 // pred_region
      // Predicated region
      $region29: #{in_conv_forward.3} parent=27 // pred_check
        %p208 = pneg %p33
      $region30: #{in_conv_forward.3} parent=27 // pred_check_branch
        %210 = sbr.rel (%p208) target = $region32
      $region31: #{in_conv_forward.3} parent=27 // pred_region
        %p211 = scmp.lt.s32.totalorder %s13, 1
        %s212 = scalar_select %p211, %s13, 1
        %s213 = smul.addr %s212, 2
        %s214 = smul.addr %s213, 4
        %s215 = scalar_lea.vmem %s0, %s214
      $region32: #{in_conv_forward.3} parent=27 // pred_fallthru
        _
    $region28: #{in_conv_forward.3} parent=5 // pred_fallthru
      _
    %p216 = scmp.le.s32.totalorder 1, %s13
    %p217 = scmp.lt.s32.totalorder %s13, 3
    %p218 = pnand %p216, %p217
    %p219 = pneg %p218
    // Predicated region
    $region33: #{in_conv_forward.3} parent=5 // pred_check
      _
    $region34: #{in_conv_forward.3} parent=5 // pred_check_branch
      %221 = sbr.rel (%p218) target = $region36
    $region35: #{in_conv_forward.3} parent=5 // pred_region
      %s222 = ssub.s32 %s13, 1
      %p223 = scmp.lt.s32.totalorder %s18, 1
      %s224 = scalar_select %p223, %s18, 1
      %s225 = smul.addr %s224, 2
      %s226 = smul.addr %s225, 4
      %s227 = scalar_lea.vmem %s0, %s226
      %p228 = pneg %p39
      %p229 = pneg %p36
      %p230 = pneg %p60
      %p231 = pneg %p57
      %p232 = pneg %p81
      %p233 = pneg %p78
      %p234 = pneg %p102
      %p235 = pneg %p99
      %p236 = pneg %p128
      %p237 = pneg %p125
      %p238 = scmp.lt.s32.totalorder %s18, 1
      %s239 = scalar_select %p238, %s18, 1
      %s240 = smul.addr %s239, 2
      %s241 = smul.addr %s240, 8
      %s242 = scalar_lea.vmem %s4, %s241
      %p243 = pneg %p154
      %p244 = pneg %p151
      %p245 = scmp.lt.s32.totalorder %s18, 1
      %s246 = scalar_select %p245, %s18, 1
      %s247 = scalar_lea.vmem %s5, %s246
      %p248 = pneg %p180
      %p249 = pneg %p177
      %p250 = scmp.lt.s32.totalorder %s18, 1
      %s251 = scalar_select %p250, %s18, 1
      %s252 = scalar_lea.vmem %s6, %s251
      %p253 = scmp.lt.s32.totalorder %s18, 1
      %s254 = scalar_select %p253, %s18, 1
      %s255 = smul.addr %s254, 2
      %s256 = smul.addr %s255, 4
      %s257 = scalar_lea.vmem %s0, %s256
      %p258 = scmp.lt.s32.totalorder %s18, 1
      %s259 = scalar_select %p258, %s18, 1
      %s260 = smul.addr %s259, 2
      %s261 = smul.addr %s260, 8
      %s262 = scalar_lea.vmem %s4, %s261
      %p263 = scmp.lt.s32.totalorder %s18, 1
      %s264 = scalar_select %p263, %s18, 1
      %s265 = scalar_lea.vmem %s5, %s264
      %p266 = scmp.lt.s32.totalorder %s18, 1
      %s267 = scalar_select %p266, %s18, 1
      %s268 = scalar_lea.vmem %s6, %s267
      %v270 = vld [vmem:[%s257] sm:$0xf]
      %v271 = vld [vmem:[%s257 + $0x4] sm:$0xf]
      %v272 = vunpack.c.l.bf16 %v270
      %v273 = vunpack.c.l.bf16 %v271
      %v274 = vld [vmem:[%s1] sm:$0x1]
      %v276 = vlaneseq
      %v277 = vshrl.u32 %v276, 7
      %v278 = vsub.s32 0, %v277
      %v279 = vrot.slane %v274, %v278
      %v281 = vmul.f32 %v272, %v279
      %v282 = vmul.f32 %v273, %v279
      %v283 = vld [vmem:[%s2] sm:$0x1]
      %v285 = vlaneseq
      %v286 = vshrl.u32 %v285, 7
      %v287 = vsub.s32 0, %v286
      %v288 = vrot.slane %v283, %v287
      %v290 = vadd.f32 %v281, %v288
      %v291 = vadd.f32 %v282, %v288
      %vm292 = vcmask 588800
      %293 = vst.msk [vmem:[#allocation2] sm:$0xff] %vm292, 0.0
      %294 = vst.msk [vmem:[#allocation2 + $0x8] sm:$0xff] %vm292, 0.0
      %vm295 = vcmask 582656
      %296 = vst.msk [vmem:[#allocation2 + $0x10] sm:$0x3] %vm295, 0.0
      %299 = vrot.lane.b32.xlu0 %v290, 4
      %v300 = vpop.permute.xlu0 %299
      %301 = vrot.lane.b32.xlu0 %v291, 4
      %v302 = vpop.permute.xlu0 %301
      %vm305 = vcmask 556064
      %306 = vst.msk [vmem:[#allocation2 + $0x1] sm:$0xff] %vm305, %v300
      %307 = vst.msk [vmem:[#allocation2 + $0x9] sm:$0xff] %vm305, %v302
      %v308 = vld [vmem:[#allocation2] sm:$0xff]
      %v309 = vld [vmem:[#allocation2 + $0x8] sm:$0xff]
      %v310 = vpack.c.bf16 %v309, %v308
      %v311 = vld [vmem:[%s3] sm:$0xf]
      %v312 = vld [vmem:[%s3 + $0x4] sm:$0xf]
      %v313 = vld [vmem:[%s3 + $0x8] sm:$0xf]
      %v314 = vld [vmem:[%s3 + $0xc] sm:$0xf]
      %v315 = vld [vmem:[%s3 + $0x10] sm:$0xf]
      %v316 = vld [vmem:[%s3 + $0x14] sm:$0xf]
      %v317 = vld [vmem:[%s3 + $0x18] sm:$0xf]
      %v318 = vld [vmem:[%s3 + $0x1c] sm:$0xf]
      %v319 = vld [vmem:[%s3 + $0x20] sm:$0xf]
      %v320 = vld [vmem:[#allocation2 + $0x1] sm:$0xff]
      %v321 = vld [vmem:[#allocation2 + $0x9] sm:$0xff]
      %v322 = vpack.c.bf16 %v321, %v320
      %s323 = scalar_lea.vmem %s3, 36
      %v324 = vld [vmem:[%s323] sm:$0xf]
      %v325 = vld [vmem:[%s323 + $0x4] sm:$0xf]
      %v326 = vld [vmem:[%s323 + $0x8] sm:$0xf]
      %v327 = vld [vmem:[%s323 + $0xc] sm:$0xf]
      %v328 = vld [vmem:[%s323 + $0x10] sm:$0xf]
      %v329 = vld [vmem:[%s323 + $0x14] sm:$0xf]
      %v330 = vld [vmem:[%s323 + $0x18] sm:$0xf]
      %v331 = vld [vmem:[%s323 + $0x1c] sm:$0xf]
      %v332 = vld [vmem:[%s323 + $0x20] sm:$0xf]
      %v342 = vunpack.c.l.b16 %v324
      %v343 = vunpack.c.l.b16 %v325
      %v344 = vunpack.c.l.b16 %v326
      %v345 = vunpack.c.l.b16 %v327
      %v346 = vunpack.c.l.b16 %v328
      %v347 = vunpack.c.l.b16 %v329
      %v348 = vunpack.c.l.b16 %v330
      %v349 = vunpack.c.l.b16 %v331
      %v350 = vunpack.c.l.b16 %v332
      %v351 = vpack.c.b16 %v343, %v342
      %v352 = vpack.c.b16 %v345, %v344
      %v353 = vpack.c.b16 %v347, %v346
      %v354 = vpack.c.b16 %v349, %v348
      %v355 = vpack.c.b16 %v350, %v350
      %v361 = vsel %vm292, %v322, 0
      %vm363 = vcmask 1043456
      %v365 = vsel %vm363, %v355, 0
      %367 = vmatprep.subr.bf16.mxu0 0
      %368 = vmatpush1.bf16.msra.mxu0 %v351
      %369 = vmatprep.subr.bf16.mxu0 0
      %370 = vmatpush1.bf16.msra.mxu0 %v352
      %371 = vmatprep.subr.bf16.mxu0 0
      %372 = vmatpush1.bf16.msra.mxu0 %v353
      %373 = vmatprep.subr.bf16.mxu0 0
      %374 = vmatpush1.bf16.msra.mxu0 %v354
      %375 = vmatprep.subr.bf16.mxu0 0
      %376 = vmatpush1.bf16.msra.mxu0 %v365
      %377 = vmatprep.subr.bf16.mxu0 0
      %378 = vmatpush1.bf16.msra.mxu0 0
      %379 = vmatprep.subr.bf16.mxu0 0
      %380 = vmatpush1.bf16.msra.mxu0 0
      %381 = vmatprep.subr.bf16.mxu0 0
      %382 = vmatpush1.bf16.msra.mxu0 0
      %383 = vmatprep.subr.bf16.mxu0 0
      %384 = vmatpush1.bf16.msra.mxu0 0
      %385 = vmatprep.subr.bf16.mxu0 0
      %386 = vmatpush1.bf16.msra.mxu0 0
      %387 = vmatprep.subr.bf16.mxu0 0
      %388 = vmatpush1.bf16.msra.mxu0 0
      %389 = vmatprep.subr.bf16.mxu0 0
      %390 = vmatpush1.bf16.msra.mxu0 0
      %391 = vmatprep.subr.bf16.mxu0 0
      %392 = vmatpush1.bf16.msra.mxu0 0
      %393 = vmatprep.subr.bf16.mxu0 0
      %394 = vmatpush1.bf16.msra.mxu0 0
      %395 = vmatprep.subr.bf16.mxu0 0
      %396 = vmatpush1.bf16.msra.mxu0 0
      %397 = vmatprep.subr.bf16.mxu0 0
      %398 = vmatpush1.bf16.msra.mxu0 0
      %399 = vmatprep.mubr.bf16.mxu0 0
      %400 = vmatmul.mubr.bf16.gmra.mrb[0].mxu0 %v361
      %v401 = vpop.f32.mrb[0].mxu0
      %v402 = vadd.f32 0.0, %v401
      %v403 = vpop.f32.mrb[0].mxu0
      %v404 = vpop.f32.mrb[0].mxu0
      %v405 = vadd.f32 0.0, %v404
      %v406 = vpop.f32.mrb[0].mxu0
      %407 = vdwg.mxu0
      %v417 = vunpack.c.l.b16 %v311
      %v418 = vunpack.c.l.b16 %v312
      %v419 = vunpack.c.l.b16 %v313
      %v420 = vunpack.c.l.b16 %v314
      %v421 = vunpack.c.l.b16 %v315
      %v422 = vunpack.c.l.b16 %v316
      %v423 = vunpack.c.l.b16 %v317
      %v424 = vunpack.c.l.b16 %v318
      %v425 = vunpack.c.l.b16 %v319
      %v426 = vpack.c.b16 %v418, %v417
      %v427 = vpack.c.b16 %v420, %v419
      %v428 = vpack.c.b16 %v422, %v421
      %v429 = vpack.c.b16 %v424, %v423
      %v430 = vpack.c.b16 %v425, %v425
      %v436 = vsel %vm292, %v310, 0
      %v439 = vsel %vm363, %v430, 0
      %441 = vmatprep.subr.bf16.mxu0 0
      %442 = vmatpush1.bf16.msra.mxu0 %v426
      %443 = vmatprep.subr.bf16.mxu0 0
      %444 = vmatpush1.bf16.msra.mxu0 %v427
      %445 = vmatprep.subr.bf16.mxu0 0
      %446 = vmatpush1.bf16.msra.mxu0 %v428
      %447 = vmatprep.subr.bf16.mxu0 0
      %448 = vmatpush1.bf16.msra.mxu0 %v429
      %449 = vmatprep.subr.bf16.mxu0 0
      %450 = vmatpush1.bf16.msra.mxu0 %v439
      %451 = vmatprep.subr.bf16.mxu0 0
      %452 = vmatpush1.bf16.msra.mxu0 0
      %453 = vmatprep.subr.bf16.mxu0 0
      %454 = vmatpush1.bf16.msra.mxu0 0
      %455 = vmatprep.subr.bf16.mxu0 0
      %456 = vmatpush1.bf16.msra.mxu0 0
      %457 = vmatprep.subr.bf16.mxu0 0
      %458 = vmatpush1.bf16.msra.mxu0 0
      %459 = vmatprep.subr.bf16.mxu0 0
      %460 = vmatpush1.bf16.msra.mxu0 0
      %461 = vmatprep.subr.bf16.mxu0 0
      %462 = vmatpush1.bf16.msra.mxu0 0
      %463 = vmatprep.subr.bf16.mxu0 0
      %464 = vmatpush1.bf16.msra.mxu0 0
      %465 = vmatprep.subr.bf16.mxu0 0
      %466 = vmatpush1.bf16.msra.mxu0 0
      %467 = vmatprep.subr.bf16.mxu0 0
      %468 = vmatpush1.bf16.msra.mxu0 0
      %469 = vmatprep.subr.bf16.mxu0 0
      %470 = vmatpush1.bf16.msra.mxu0 0
      %471 = vmatprep.subr.bf16.mxu0 0
      %472 = vmatpush1.bf16.msra.mxu0 0
      %473 = vmatprep.mubr.bf16.mxu0 0
      %474 = vmatmul.mubr.bf16.gmra.mrb[0].mxu0 %v436
      %v475 = vpop.f32.mrb[0].mxu0
      %v476 = vadd.f32 %v402, %v475
      %v477 = vpop.f32.mrb[0].mxu0
      %v478 = vpop.f32.mrb[0].mxu0
      %v479 = vadd.f32 %v405, %v478
      %v480 = vpop.f32.mrb[0].mxu0
      %481 = vdwg.mxu0
      %v482 = vld [vmem:[#allocation2 + $0x2] sm:$0xff]
      %v483 = vld [vmem:[#allocation2 + $0xa] sm:$0xff]
      %v484 = vpack.c.bf16 %v483, %v482
      %s485 = scalar_lea.vmem %s3, 72
      %v486 = vld [vmem:[%s485] sm:$0xf]
      %v487 = vld [vmem:[%s485 + $0x4] sm:$0xf]
      %v488 = vld [vmem:[%s485 + $0x8] sm:$0xf]
      %v489 = vld [vmem:[%s485 + $0xc] sm:$0xf]
      %v490 = vld [vmem:[%s485 + $0x10] sm:$0xf]
      %v491 = vld [vmem:[%s485 + $0x14] sm:$0xf]
      %v492 = vld [vmem:[%s485 + $0x18] sm:$0xf]
      %v493 = vld [vmem:[%s485 + $0x1c] sm:$0xf]
      %v494 = vld [vmem:[%s485 + $0x20] sm:$0xf]
      %v504 = vunpack.c.l.b16 %v486
      %v505 = vunpack.c.l.b16 %v487
      %v506 = vunpack.c.l.b16 %v488
      %v507 = vunpack.c.l.b16 %v489
      %v508 = vunpack.c.l.b16 %v490
      %v509 = vunpack.c.l.b16 %v491
      %v510 = vunpack.c.l.b16 %v492
      %v511 = vunpack.c.l.b16 %v493
      %v512 = vunpack.c.l.b16 %v494
      %v513 = vpack.c.b16 %v505, %v504
      %v514 = vpack.c.b16 %v507, %v506
      %v515 = vpack.c.b16 %v509, %v508
      %v516 = vpack.c.b16 %v511, %v510
      %v517 = vpack.c.b16 %v512, %v512
      %v523 = vsel %vm292, %v484, 0
      %v526 = vsel %vm363, %v517, 0
      %528 = vmatprep.subr.bf16.mxu0 0
      %529 = vmatpush1.bf16.msra.mxu0 %v513
      %530 = vmatprep.subr.bf16.mxu0 0
      %531 = vmatpush1.bf16.msra.mxu0 %v514
      %532 = vmatprep.subr.bf16.mxu0 0
      %533 = vmatpush1.bf16.msra.mxu0 %v515
      %534 = vmatprep.subr.bf16.mxu0 0
      %535 = vmatpush1.bf16.msra.mxu0 %v516
      %536 = vmatprep.subr.bf16.mxu0 0
      %537 = vmatpush1.bf16.msra.mxu0 %v526
      %538 = vmatprep.subr.bf16.mxu0 0
      %539 = vmatpush1.bf16.msra.mxu0 0
      %540 = vmatprep.subr.bf16.mxu0 0
      %541 = vmatpush1.bf16.msra.mxu0 0
      %542 = vmatprep.subr.bf16.mxu0 0
      %543 = vmatpush1.bf16.msra.mxu0 0
      %544 = vmatprep.subr.bf16.mxu0 0
      %545 = vmatpush1.bf16.msra.mxu0 0
      %546 = vmatprep.subr.bf16.mxu0 0
      %547 = vmatpush1.bf16.msra.mxu0 0
      %548 = vmatprep.subr.bf16.mxu0 0
      %549 = vmatpush1.bf16.msra.mxu0 0
      %550 = vmatprep.subr.bf16.mxu0 0
      %551 = vmatpush1.bf16.msra.mxu0 0
      %552 = vmatprep.subr.bf16.mxu0 0
      %553 = vmatpush1.bf16.msra.mxu0 0
      %554 = vmatprep.subr.bf16.mxu0 0
      %555 = vmatpush1.bf16.msra.mxu0 0
      %556 = vmatprep.subr.bf16.mxu0 0
      %557 = vmatpush1.bf16.msra.mxu0 0
      %558 = vmatprep.subr.bf16.mxu0 0
      %559 = vmatpush1.bf16.msra.mxu0 0
      %560 = vmatprep.mubr.bf16.mxu0 0
      %561 = vmatmul.mubr.bf16.gmra.mrb[0].mxu0 %v523
      %v562 = vpop.f32.mrb[0].mxu0
      %v563 = vadd.f32 0.0, %v562
      %v564 = vpop.f32.mrb[0].mxu0
      %v565 = vpop.f32.mrb[0].mxu0
      %v566 = vadd.f32 0.0, %v565
      %v567 = vpop.f32.mrb[0].mxu0
      %568 = vdwg.mxu0
      %v569 = vadd.f32 %v476, %v563
      %v570 = vadd.f32 %v479, %v566
      %v571 = vadd.f32 %v569, %v570
      %v572 = vrot.slane %v571, 4
      %v573 = vadd.f32 %v571, %v572
      %v574 = vrot.slane %v573, 2
      %v575 = vadd.f32 %v573, %v574
      %v576 = vrot.slane %v575, 1
      %v577 = vadd.f32 %v575, %v576
      %578 = vst [vmem:[%s265] sm:$0x1] %v577
      %v579 = vmul.f32 %v569, %v569
      %v580 = vmul.f32 %v570, %v570
      %v581 = vadd.f32 %v579, %v580
      %v582 = vrot.slane %v581, 4
      %v583 = vadd.f32 %v581, %v582
      %v584 = vrot.slane %v583, 2
      %v585 = vadd.f32 %v583, %v584
      %v586 = vrot.slane %v585, 1
      %v587 = vadd.f32 %v585, %v586
      %588 = vst [vmem:[%s268] sm:$0x1] %v587
      %589 = vst [vmem:[%s262] sm:$0xff] %v569
      %590 = vst [vmem:[%s262 + $0x8] sm:$0xff] %v570
      %p591 = scmp.lt.s32.totalorder %s18, 1
      %s592 = scalar_select %p591, %s18, 1
      %s593 = smul.addr %s592, 2
      %s594 = smul.addr %s593, 8
      %s595 = scalar_lea.vmem %s4, %s594
      %p596 = scmp.lt.s32.totalorder %s18, 1
      %s597 = scalar_select %p596, %s18, 1
      %s598 = scalar_lea.vmem %s5, %s597
      %p599 = scmp.lt.s32.totalorder %s18, 1
      %s600 = scalar_select %p599, %s18, 1
      %s601 = scalar_lea.vmem %s6, %s600
      // Predicated region
      $region37: #{in_conv_forward.3} parent=35 // pred_check
        %p602 = pneg %p125
      $region38: #{in_conv_forward.3} parent=35 // pred_check_branch
        %604 = sbr.rel (%p602) target = $region40
      $region39: #{in_conv_forward.3} parent=35 // pred_region
        _
      $region40: #{in_conv_forward.3} parent=35 // pred_fallthru
        _
      // Predicated region
      $region41: #{in_conv_forward.3} parent=35 // pred_check
        %p605 = pneg %p151
      $region42: #{in_conv_forward.3} parent=35 // pred_check_branch
        %607 = sbr.rel (%p605) target = $region44
      $region43: #{in_conv_forward.3} parent=35 // pred_region
        _
      $region44: #{in_conv_forward.3} parent=35 // pred_fallthru
        _
      // Predicated region
      $region45: #{in_conv_forward.3} parent=35 // pred_check
        %p608 = pneg %p177
      $region46: #{in_conv_forward.3} parent=35 // pred_check_branch
        %610 = sbr.rel (%p608) target = $region48
      $region47: #{in_conv_forward.3} parent=35 // pred_region
        _
      $region48: #{in_conv_forward.3} parent=35 // pred_fallthru
        _
    $region36: #{in_conv_forward.3} parent=5 // pred_fallthru
      _
    %p611 = scmp.le.s32.totalorder 2, %s13
    // Predicated region
    $region49: #{in_conv_forward.3} parent=5 // pred_check
      %p612 = pneg %p611
    $region50: #{in_conv_forward.3} parent=5 // pred_check_branch
      %614 = sbr.rel (%p612) target = $region52
    $region51: #{in_conv_forward.3} parent=5 // pred_region
      %s615 = ssub.s32 %s13, 2
      // Predicated region
      $region53: #{in_conv_forward.3} parent=51 // pred_check
        %p616 = pneg %p131
      $region54: #{in_conv_forward.3} parent=51 // pred_check_branch
        %618 = sbr.rel (%p616) target = $region56
      $region55: #{in_conv_forward.3} parent=51 // pred_region
        %p619 = scmp.lt.s32.totalorder %s19, 1
        %s620 = scalar_select %p619, %s19, 1
        %s621 = smul.addr %s620, 2
        %s622 = smul.addr %s621, 8
        %s623 = scalar_lea.vmem %s4, %s622
      $region56: #{in_conv_forward.3} parent=51 // pred_fallthru
        _
      // Predicated region
      $region57: #{in_conv_forward.3} parent=51 // pred_check
        %p624 = pneg %p157
      $region58: #{in_conv_forward.3} parent=51 // pred_check_branch
        %626 = sbr.rel (%p624) target = $region60
      $region59: #{in_conv_forward.3} parent=51 // pred_region
        %p627 = scmp.lt.s32.totalorder %s19, 1
        %s628 = scalar_select %p627, %s19, 1
        %s629 = scalar_lea.vmem %s5, %s628
      $region60: #{in_conv_forward.3} parent=51 // pred_fallthru
        _
      // Predicated region
      $region61: #{in_conv_forward.3} parent=51 // pred_check
        %p630 = pneg %p183
      $region62: #{in_conv_forward.3} parent=51 // pred_check_branch
        %632 = sbr.rel (%p630) target = $region64
      $region63: #{in_conv_forward.3} parent=51 // pred_region
        %p633 = scmp.lt.s32.totalorder %s19, 1
        %s634 = scalar_select %p633, %s19, 1
        %s635 = scalar_lea.vmem %s6, %s634
      $region64: #{in_conv_forward.3} parent=51 // pred_fallthru
        _
    $region52: #{in_conv_forward.3} parent=5 // pred_fallthru
      _
  $region6: #{in_conv_forward.3} parent=0 // loop_footer
    %s17 = sadd.s32 1, %s13
  $region7: #{in_conv_forward.3} parent=0 // loop_footer_branch
    %12 = sbr.rel target = $region3
  $region8: #{in_conv_forward.3} parent=0 // loop_exit
    _

// kernel: tile.30
$region0: #{tile.30}
  #allocation0 [shape = 's32[1]{0}', space=sflag, size = 0x4, scoped, tag = 'scoped memory for tile.30']
  %s0 = inlined_call_operand.vmem [shape: f32[8], index: 0, kind: input, shape index: {}]
  %s1 = inlined_call_operand.vmem [shape: f32[16,8], index: 1, kind: output, shape index: {}]
  // Predicated region
  $region2: #{tile.30} parent=0 // pred_check
    _
  $region3: #{tile.30} parent=0 // pred_check_branch
    %3 = sbr.rel (0) target = $region5
  $region4: #{tile.30} parent=0 // pred_region
    _
  $region5: #{tile.30} parent=0 // pred_fallthru
    _
  %v4 = vld [vmem:[%s0] ss:$0 sm:$0xff]
  %5 = vst [vmem:[%s1] sm:$0xff] %v4
  %s6 = scalar_lea.vmem %s1, 8
  %7 = vst [vmem:[%s6] sm:$0xff] %v4

// kernel: tile.31
$region0: #{tile.31}
  %s0 = inlined_call_operand.vmem [shape: f32[16,8], index: 0, kind: input, shape index: {}]
  %s1 = inlined_call_operand.vmem [shape: f32[1,128], index: 1, kind: output, shape index: {}]
  $region1: #{tile.31} parent=0
    #allocation0 [shape = 'u8[4096]{0}', space=vmem, size = 0x1000, scoped, tag = 'scoped mem for output reshape']
    %v2 = vld [vmem:[%s0] sm:$0x1]
    %vm3 = vcmask 64512
    %4 = vst.msk [vmem:[#allocation0] sm:$0x1] %vm3, %v2
    %s5 = scalar_lea.vmem %s0, 15
    %v6 = vld [vmem:[%s5] sm:$0x1]
    %7 = vrot.lane.b32.xlu0 %v6, 120
    %v8 = vpop.permute.xlu0 %7
    %vm9 = vcmask 1048512
    %10 = vst.msk [vmem:[#allocation0] sm:$0x1] %vm9, %v8
    %s11 = scalar_lea.vmem %s0, 14
    %v12 = vld [vmem:[%s11] sm:$0x1]
    %13 = vrot.lane.b32.xlu0 %v12, 112
    %v14 = vpop.permute.xlu0 %13
    %vm15 = vcmask 982912
    %16 = vst.msk [vmem:[#allocation0] sm:$0x1] %vm15, %v14
    %s17 = scalar_lea.vmem %s0, 13
    %v18 = vld [vmem:[%s17] sm:$0x1]
    %19 = vrot.lane.b32.xlu0 %v18, 104
    %v20 = vpop.permute.xlu0 %19
    %vm21 = vcmask 917312
    %22 = vst.msk [vmem:[#allocation0] sm:$0x1] %vm21, %v20
    %s23 = scalar_lea.vmem %s0, 12
    %v24 = vld [vmem:[%s23] sm:$0x1]
    %25 = vrot.lane.b32.xlu0 %v24, 96
    %v26 = vpop.permute.xlu0 %25
    %vm27 = vcmask 851712
    %28 = vst.msk [vmem:[#allocation0] sm:$0x1] %vm27, %v26
    %s29 = scalar_lea.vmem %s0, 11
    %v30 = vld [vmem:[%s29] sm:$0x1]
    %31 = vrot.lane.b32.xlu0 %v30, 88
    %v32 = vpop.permute.xlu0 %31
    %vm33 = vcmask 786112
    %34 = vst.msk [vmem:[#allocation0] sm:$0x1] %vm33, %v32
    %s35 = scalar_lea.vmem %s0, 10
    %v36 = vld [vmem:[%s35] sm:$0x1]
    %37 = vrot.lane.b32.xlu0 %v36, 80
    %v38 = vpop.permute.xlu0 %37
    %vm39 = vcmask 720512
    %40 = vst.msk [vmem:[#allocation0] sm:$0x1] %vm39, %v38
    %s41 = scalar_lea.vmem %s0, 9
    %v42 = vld [vmem:[%s41] sm:$0x1]
    %43 = vrot.lane.b32.xlu0 %v42, 72
    %v44 = vpop.permute.xlu0 %43
    %vm45 = vcmask 654912
    %46 = vst.msk [vmem:[#allocation0] sm:$0x1] %vm45, %v44
    %s47 = scalar_lea.vmem %s0, 8
    %v48 = vld [vmem:[%s47] sm:$0x1]
    %49 = vrot.lane.b32.xlu0 %v48, 64
    %v50 = vpop.permute.xlu0 %49
    %vm51 = vcmask 589312
    %52 = vst.msk [vmem:[#allocation0] sm:$0x1] %vm51, %v50
    %s53 = scalar_lea.vmem %s0, 7
    %v54 = vld [vmem:[%s53] sm:$0x1]
    %55 = vrot.lane.b32.xlu0 %v54, 56
    %v56 = vpop.permute.xlu0 %55
    %vm57 = vcmask 523712
    %58 = vst.msk [vmem:[#allocation0] sm:$0x1] %vm57, %v56
    %s59 = scalar_lea.vmem %s0, 6
    %v60 = vld [vmem:[%s59] sm:$0x1]
    %61 = vrot.lane.b32.xlu0 %v60, 48
    %v62 = vpop.permute.xlu0 %61
    %vm63 = vcmask 458112
    %64 = vst.msk [vmem:[#allocation0] sm:$0x1] %vm63, %v62
    %s65 = scalar_lea.vmem %s0, 5
    %v66 = vld [vmem:[%s65] sm:$0x1]
    %67 = vrot.lane.b32.xlu0 %v66, 40
    %v68 = vpop.permute.xlu0 %67
    %vm69 = vcmask 392512
    %70 = vst.msk [vmem:[#allocation0] sm:$0x1] %vm69, %v68
    %s71 = scalar_lea.vmem %s0, 4
    %v72 = vld [vmem:[%s71] sm:$0x1]
    %73 = vrot.lane.b32.xlu0 %v72, 32
    %v74 = vpop.permute.xlu0 %73
    %vm75 = vcmask 326912
    %76 = vst.msk [vmem:[#allocation0] sm:$0x1] %vm75, %v74
    %s77 = scalar_lea.vmem %s0, 3
    %v78 = vld [vmem:[%s77] sm:$0x1]
    %79 = vrot.lane.b32.xlu0 %v78, 24
    %v80 = vpop.permute.xlu0 %79
    %vm81 = vcmask 261312
    %82 = vst.msk [vmem:[#allocation0] sm:$0x1] %vm81, %v80
    %s83 = scalar_lea.vmem %s0, 2
    %v84 = vld [vmem:[%s83] sm:$0x1]
    %85 = vrot.lane.b32.xlu0 %v84, 16
    %v86 = vpop.permute.xlu0 %85
    %vm87 = vcmask 195712
    %88 = vst.msk [vmem:[#allocation0] sm:$0x1] %vm87, %v86
    %s89 = scalar_lea.vmem %s0, 1
    %v90 = vld [vmem:[%s89] sm:$0x1]
    %91 = vrot.lane.b32.xlu0 %v90, 8
    %v92 = vpop.permute.xlu0 %91
    %vm93 = vcmask 130112
    %94 = vst.msk [vmem:[#allocation0] sm:$0x1] %vm93, %v92
    %s96 = sshllo.u32 0, 1
    %v98 = vld [vmem:[#allocation0] sm:%s96]
    %s99 = sshllo.u32 0, 1
    %100 = vst [vmem:[%s1] sm:%s99] %v98

// kernel: in_conv_forward.4
$region0: #{in_conv_forward.4}
  #allocation0 [shape = 'u32[]', space=smem, size = 0x4, offset = 0x4, fixed_abs, tag = 'smem constant byte address 0x4 - core index']
  #allocation1 [shape = 'u32[144,128]{1,0:T(1,128)}', space=vmem, size = 0x12000, scoped, tag = 'internal scratch']
  #allocation2 [shape = 'f32[18,144]{1,0:T(8,128)}', space=vmem, size = 0x6000, scoped, tag = 'scratch operand']
  %s0 = inlined_call_operand.vmem [shape: f32[2,16,128], index: 0, kind: input, shape index: {}]
  %s1 = inlined_call_operand.vmem [shape: f32[1,128], index: 1, kind: input, shape index: {}]
  %s2 = inlined_call_operand.vmem [shape: f32[1,128], index: 2, kind: input, shape index: {}]
  %s3 = inlined_call_operand.vmem [shape: bf16[3,144,128], index: 3, kind: input, shape index: {}]
  %s4 = inlined_call_operand.vmem [shape: f32[2,16,128], index: 4, kind: output, shape index: {0}]
  %s5 = inlined_call_operand.vmem [shape: f32[2,1,128], index: 5, kind: output, shape index: {1}]
  %s6 = inlined_call_operand.vmem [shape: f32[2,1,128], index: 6, kind: output, shape index: {2}]
  %7 = xla_tuple %s4, %s5, %s6
  %s8 = sld [smem:[#allocation0]]
  $region65: #{in_conv_forward.4} parent=0
    _
  %s10 = ssub.s32 1, %s8
  %s11 = scalar_select 0, %s10, %s8
  loop: start=0, step=1, limit=4
  $region2: #{in_conv_forward.4} parent=0 // loop_pre_header
    _
  $region3: #{in_conv_forward.4} parent=0 // loop_header
    %s13 = sphi 0, %s17
    %p14 = scmp.ge.s32.totalorder %s13, 4
    %s23 = sphi 0, %s25
    %s26 = sphi 0, %s23
    %s27 = sphi 0, %s26
    %s43 = sphi 0, %s27
    %s47 = sphi 0, %s47
    %s49 = sphi 0, %s47
    %s50 = sphi 0, %s49
    %s64 = sphi 0, %s50
    %s68 = sphi 0, %s68
    %s70 = sphi 0, %s68
    %s71 = sphi 0, %s70
    %s85 = sphi 0, %s71
    %s89 = sphi 0, %s89
    %s91 = sphi 0, %s89
    %s92 = sphi 0, %s91
    %s106 = sphi 0, %s92
    %s112 = sphi 0, %s114
    %s115 = sphi 0, %s112
    %s116 = sphi 0, %s115
    %s132 = sphi 0, %s116
    %s138 = sphi 0, %s140
    %s141 = sphi 0, %s138
    %s142 = sphi 0, %s141
    %s158 = sphi 0, %s142
    %s164 = sphi 0, %s166
    %s167 = sphi 0, %s164
    %s168 = sphi 0, %s167
    %s184 = sphi 0, %s168
  $region4: #{in_conv_forward.4} parent=0 // loop_header_branch
    %16 = sbr.rel (%p14) target = $region8
  $region5: #{in_conv_forward.4} parent=0 // loop_body
    %s18 = ssub.s32 %s13, 1
    %s19 = ssub.s32 %s13, 2
    %s20 = sadd.s32 %s13, 1
    %s21 = ssub.s32 %s13, %s20
    %p22 = scmp.eq.s32.totalorder %s21, 0
    %s24 = sadd.s32 %s23, 1
    %s25 = scalar_select %p22, %s23, %s24
    %p28 = pneg %p22
    %p29 = scmp.eq.s32.totalorder %s13, 1
    %p30 = por %p28, %p29
    %p31 = scmp.ne.s32.totalorder %s23, %s26
    %p32 = scmp.eq.s32.totalorder %s13, 0
    %p33 = por %p31, %p32
    %p34 = scmp.ne.s32.totalorder %s23, %s26
    %p35 = scmp.eq.s32.totalorder %s18, 1
    %p36 = por %p34, %p35
    %p37 = scmp.ne.s32.totalorder %s26, %s27
    %p38 = scmp.eq.s32.totalorder %s18, 0
    %p39 = por %p37, %p38
    %p40 = scmp.ne.s32.totalorder %s26, %s27
    %p41 = scmp.eq.s32.totalorder %s19, 1
    %p42 = por %p40, %p41
    %p44 = scmp.ne.s32.totalorder %s27, %s43
    %p45 = scmp.eq.s32.totalorder %s19, 0
    %p46 = por %p44, %p45
    %s48 = sadd.s32 %s47, 1
    %p51 = scmp.eq.s32.totalorder %s13, 1
    %p52 = scmp.ne.s32.totalorder %s47, %s49
    %p53 = scmp.eq.s32.totalorder %s13, 0
    %p54 = por %p52, %p53
    %p55 = scmp.ne.s32.totalorder %s47, %s49
    %p56 = scmp.eq.s32.totalorder %s18, 1
    %p57 = por %p55, %p56
    %p58 = scmp.ne.s32.totalorder %s49, %s50
    %p59 = scmp.eq.s32.totalorder %s18, 0
    %p60 = por %p58, %p59
    %p61 = scmp.ne.s32.totalorder %s49, %s50
    %p62 = scmp.eq.s32.totalorder %s19, 1
    %p63 = por %p61, %p62
    %p65 = scmp.ne.s32.totalorder %s50, %s64
    %p66 = scmp.eq.s32.totalorder %s19, 0
    %p67 = por %p65, %p66
    %s69 = sadd.s32 %s68, 1
    %p72 = scmp.eq.s32.totalorder %s13, 1
    %p73 = scmp.ne.s32.totalorder %s68, %s70
    %p74 = scmp.eq.s32.totalorder %s13, 0
    %p75 = por %p73, %p74
    %p76 = scmp.ne.s32.totalorder %s68, %s70
    %p77 = scmp.eq.s32.totalorder %s18, 1
    %p78 = por %p76, %p77
    %p79 = scmp.ne.s32.totalorder %s70, %s71
    %p80 = scmp.eq.s32.totalorder %s18, 0
    %p81 = por %p79, %p80
    %p82 = scmp.ne.s32.totalorder %s70, %s71
    %p83 = scmp.eq.s32.totalorder %s19, 1
    %p84 = por %p82, %p83
    %p86 = scmp.ne.s32.totalorder %s71, %s85
    %p87 = scmp.eq.s32.totalorder %s19, 0
    %p88 = por %p86, %p87
    %s90 = sadd.s32 %s89, 1
    %p93 = scmp.eq.s32.totalorder %s13, 1
    %p94 = scmp.ne.s32.totalorder %s89, %s91
    %p95 = scmp.eq.s32.totalorder %s13, 0
    %p96 = por %p94, %p95
    %p97 = scmp.ne.s32.totalorder %s89, %s91
    %p98 = scmp.eq.s32.totalorder %s18, 1
    %p99 = por %p97, %p98
    %p100 = scmp.ne.s32.totalorder %s91, %s92
    %p101 = scmp.eq.s32.totalorder %s18, 0
    %p102 = por %p100, %p101
    %p103 = scmp.ne.s32.totalorder %s91, %s92
    %p104 = scmp.eq.s32.totalorder %s19, 1
    %p105 = por %p103, %p104
    %p107 = scmp.ne.s32.totalorder %s92, %s106
    %p108 = scmp.eq.s32.totalorder %s19, 0
    %p109 = por %p107, %p108
    %s110 = ssub.s32 %s13, %s20
    %p111 = scmp.eq.s32.totalorder %s110, 0
    %s113 = sadd.s32 %s112, 1
    %s114 = scalar_select %p111, %s112, %s113
    %p117 = pneg %p111
    %p118 = scmp.eq.s32.totalorder %s13, 1
    %p119 = por %p117, %p118
    %p120 = scmp.ne.s32.totalorder %s112, %s115
    %p121 = scmp.eq.s32.totalorder %s13, 0
    %p122 = por %p120, %p121
    %p123 = scmp.ne.s32.totalorder %s112, %s115
    %p124 = scmp.eq.s32.totalorder %s18, 1
    %p125 = por %p123, %p124
    %p126 = scmp.ne.s32.totalorder %s115, %s116
    %p127 = scmp.eq.s32.totalorder %s18, 0
    %p128 = por %p126, %p127
    %p129 = scmp.ne.s32.totalorder %s115, %s116
    %p130 = scmp.eq.s32.totalorder %s19, 1
    %p131 = por %p129, %p130
    %p133 = scmp.ne.s32.totalorder %s116, %s132
    %p134 = scmp.eq.s32.totalorder %s19, 0
    %p135 = por %p133, %p134
    %s136 = ssub.s32 %s13, %s20
    %p137 = scmp.eq.s32.totalorder %s136, 0
    %s139 = sadd.s32 %s138, 1
    %s140 = scalar_select %p137, %s138, %s139
    %p143 = pneg %p137
    %p144 = scmp.eq.s32.totalorder %s13, 1
    %p145 = por %p143, %p144
    %p146 = scmp.ne.s32.totalorder %s138, %s141
    %p147 = scmp.eq.s32.totalorder %s13, 0
    %p148 = por %p146, %p147
    %p149 = scmp.ne.s32.totalorder %s138, %s141
    %p150 = scmp.eq.s32.totalorder %s18, 1
    %p151 = por %p149, %p150
    %p152 = scmp.ne.s32.totalorder %s141, %s142
    %p153 = scmp.eq.s32.totalorder %s18, 0
    %p154 = por %p152, %p153
    %p155 = scmp.ne.s32.totalorder %s141, %s142
    %p156 = scmp.eq.s32.totalorder %s19, 1
    %p157 = por %p155, %p156
    %p159 = scmp.ne.s32.totalorder %s142, %s158
    %p160 = scmp.eq.s32.totalorder %s19, 0
    %p161 = por %p159, %p160
    %s162 = ssub.s32 %s13, %s20
    %p163 = scmp.eq.s32.totalorder %s162, 0
    %s165 = sadd.s32 %s164, 1
    %s166 = scalar_select %p163, %s164, %s165
    %p169 = pneg %p163
    %p170 = scmp.eq.s32.totalorder %s13, 1
    %p171 = por %p169, %p170
    %p172 = scmp.ne.s32.totalorder %s164, %s167
    %p173 = scmp.eq.s32.totalorder %s13, 0
    %p174 = por %p172, %p173
    %p175 = scmp.ne.s32.totalorder %s164, %s167
    %p176 = scmp.eq.s32.totalorder %s18, 1
    %p177 = por %p175, %p176
    %p178 = scmp.ne.s32.totalorder %s167, %s168
    %p179 = scmp.eq.s32.totalorder %s18, 0
    %p180 = por %p178, %p179
    %p181 = scmp.ne.s32.totalorder %s167, %s168
    %p182 = scmp.eq.s32.totalorder %s19, 1
    %p183 = por %p181, %p182
    %p185 = scmp.ne.s32.totalorder %s168, %s184
    %p186 = scmp.eq.s32.totalorder %s19, 0
    %p187 = por %p185, %p186
    %p188 = scmp.le.s32.totalorder 1, %s13
    %p189 = scmp.lt.s32.totalorder %s13, 3
    %p190 = pnand %p188, %p189
    %p191 = pneg %p190
    // Predicated region
    $region9: #{in_conv_forward.4} parent=5 // pred_check
      _
    $region10: #{in_conv_forward.4} parent=5 // pred_check_branch
      %193 = sbr.rel (%p190) target = $region12
    $region11: #{in_conv_forward.4} parent=5 // pred_region
      %s194 = ssub.s32 %s13, 1
      // Predicated region
      $region13: #{in_conv_forward.4} parent=11 // pred_check
        %p195 = pneg %p60
      $region14: #{in_conv_forward.4} parent=11 // pred_check_branch
        %197 = sbr.rel (%p195) target = $region16
      $region15: #{in_conv_forward.4} parent=11 // pred_region
        _
      $region16: #{in_conv_forward.4} parent=11 // pred_fallthru
        _
      // Predicated region
      $region17: #{in_conv_forward.4} parent=11 // pred_check
        %p198 = pneg %p81
      $region18: #{in_conv_forward.4} parent=11 // pred_check_branch
        %200 = sbr.rel (%p198) target = $region20
      $region19: #{in_conv_forward.4} parent=11 // pred_region
        _
      $region20: #{in_conv_forward.4} parent=11 // pred_fallthru
        _
      // Predicated region
      $region21: #{in_conv_forward.4} parent=11 // pred_check
        %p201 = pneg %p102
      $region22: #{in_conv_forward.4} parent=11 // pred_check_branch
        %203 = sbr.rel (%p201) target = $region24
      $region23: #{in_conv_forward.4} parent=11 // pred_region
        _
      $region24: #{in_conv_forward.4} parent=11 // pred_fallthru
        _
    $region12: #{in_conv_forward.4} parent=5 // pred_fallthru
      _
    %p204 = scmp.lt.s32.totalorder %s13, 2
    // Predicated region
    $region25: #{in_conv_forward.4} parent=5 // pred_check
      %p205 = pneg %p204
    $region26: #{in_conv_forward.4} parent=5 // pred_check_branch
      %207 = sbr.rel (%p205) target = $region28
    $region27: #{in_conv_forward.4} parent=5 // pred_region
      // Predicated region
      $region29: #{in_conv_forward.4} parent=27 // pred_check
        %p208 = pneg %p33
      $region30: #{in_conv_forward.4} parent=27 // pred_check_branch
        %210 = sbr.rel (%p208) target = $region32
      $region31: #{in_conv_forward.4} parent=27 // pred_region
        %p211 = scmp.lt.s32.totalorder %s13, 1
        %s212 = scalar_select %p211, %s13, 1
        %s213 = smul.addr %s212, 2
        %s214 = smul.addr %s213, 8
        %s215 = scalar_lea.vmem %s0, %s214
      $region32: #{in_conv_forward.4} parent=27 // pred_fallthru
        _
    $region28: #{in_conv_forward.4} parent=5 // pred_fallthru
      _
    %p216 = scmp.le.s32.totalorder 1, %s13
    %p217 = scmp.lt.s32.totalorder %s13, 3
    %p218 = pnand %p216, %p217
    %p219 = pneg %p218
    // Predicated region
    $region33: #{in_conv_forward.4} parent=5 // pred_check
      _
    $region34: #{in_conv_forward.4} parent=5 // pred_check_branch
      %221 = sbr.rel (%p218) target = $region36
    $region35: #{in_conv_forward.4} parent=5 // pred_region
      %s222 = ssub.s32 %s13, 1
      %p223 = scmp.lt.s32.totalorder %s18, 1
      %s224 = scalar_select %p223, %s18, 1
      %s225 = smul.addr %s224, 2
      %s226 = smul.addr %s225, 8
      %s227 = scalar_lea.vmem %s0, %s226
      %p228 = pneg %p39
      %p229 = pneg %p36
      %p230 = pneg %p60
      %p231 = pneg %p57
      %p232 = pneg %p81
      %p233 = pneg %p78
      %p234 = pneg %p102
      %p235 = pneg %p99
      %p236 = pneg %p128
      %p237 = pneg %p125
      %p238 = scmp.lt.s32.totalorder %s18, 1
      %s239 = scalar_select %p238, %s18, 1
      %s240 = smul.addr %s239, 2
      %s241 = smul.addr %s240, 8
      %s242 = scalar_lea.vmem %s4, %s241
      %p243 = pneg %p154
      %p244 = pneg %p151
      %p245 = scmp.lt.s32.totalorder %s18, 1
      %s246 = scalar_select %p245, %s18, 1
      %s247 = scalar_lea.vmem %s5, %s246
      %p248 = pneg %p180
      %p249 = pneg %p177
      %p250 = scmp.lt.s32.totalorder %s18, 1
      %s251 = scalar_select %p250, %s18, 1
      %s252 = scalar_lea.vmem %s6, %s251
      %p253 = scmp.lt.s32.totalorder %s18, 1
      %s254 = scalar_select %p253, %s18, 1
      %s255 = smul.addr %s254, 2
      %s256 = smul.addr %s255, 8
      %s257 = scalar_lea.vmem %s0, %s256
      %p258 = scmp.lt.s32.totalorder %s18, 1
      %s259 = scalar_select %p258, %s18, 1
      %s260 = smul.addr %s259, 2
      %s261 = smul.addr %s260, 8
      %s262 = scalar_lea.vmem %s4, %s261
      %p263 = scmp.lt.s32.totalorder %s18, 1
      %s264 = scalar_select %p263, %s18, 1
      %s265 = scalar_lea.vmem %s5, %s264
      %p266 = scmp.lt.s32.totalorder %s18, 1
      %s267 = scalar_select %p266, %s18, 1
      %s268 = scalar_lea.vmem %s6, %s267
      %v270 = vld [vmem:[%s257] sm:$0xff]
      %v271 = vld [vmem:[%s257 + $0x8] sm:$0xff]
      %v272 = vld [vmem:[%s1] sm:$0x1]
      %v274 = vlaneseq
      %v275 = vshrl.u32 %v274, 7
      %v276 = vsub.s32 0, %v275
      %v277 = vrot.slane %v272, %v276
      %v279 = vmul.f32 %v270, %v277
      %v280 = vmul.f32 %v271, %v277
      %v281 = vld [vmem:[%s2] sm:$0x1]
      %v283 = vlaneseq
      %v284 = vshrl.u32 %v283, 7
      %v285 = vsub.s32 0, %v284
      %v286 = vrot.slane %v281, %v285
      %v288 = vadd.f32 %v279, %v286
      %v289 = vadd.f32 %v280, %v286
      %v290 = vmax.f32 %v288, 0.0
      %v291 = vmax.f32 %v289, 0.0
      %292 = vst [vmem:[#allocation2] sm:$0xff] 0.0
      %vm293 = vcmask 130048
      %294 = vst.msk [vmem:[#allocation2 + $0x8] sm:$0xff] %vm293, 0.0
      %295 = vst [vmem:[#allocation2 + $0x10] sm:$0xff] 0.0
      %296 = vst.msk [vmem:[#allocation2 + $0x18] sm:$0xff] %vm293, 0.0
      %297 = vst [vmem:[#allocation2 + $0x20] sm:$0x3] 0.0
      %vm298 = vcmask 123904
      %299 = vst.msk [vmem:[#allocation2 + $0x28] sm:$0x3] %vm298, 0.0
      %vm302 = vcmask 1040384
      %v303 = vrot.slane %v290, 7
      %v304 = vrot.slane %v291, 7
      %v305 = vsel %vm302, %v303, %v304
      %306 = vrot.lane.b32.xlu0 %v303, 8
      %v307 = vpop.permute.xlu0 %306
      %308 = vrot.lane.b32.xlu0 %v305, 8
      %v309 = vpop.permute.xlu0 %308
      %310 = vrot.lane.b32.xlu0 %v304, 8
      %v311 = vpop.permute.xlu0 %310
      %vm315 = vcmask 1047617
      %316 = vst.msk [vmem:[#allocation2] sm:$0xfe] %vm315, %v307
      %vm317 = vcmask 64513
      %318 = vst.msk [vmem:[#allocation2 + $0x8] sm:$0xfe] %vm317, %v307
      %vm319 = vcmask 1047616
      %320 = vst.msk [vmem:[#allocation2 + $0x10] sm:$0xff] %vm319, %v309
      %vm321 = vcmask 64512
      %322 = vst.msk [vmem:[#allocation2 + $0x18] sm:$0xff] %vm321, %v309
      %vm323 = vcmask 1040448
      %324 = vst.msk [vmem:[#allocation2 + $0x20] sm:$0x1] %vm323, %v311
      %vm325 = vcmask 57344
      %326 = vst.msk [vmem:[#allocation2 + $0x28] sm:$0x1] %vm325, %v311
      %v327 = vld [vmem:[#allocation2] sm:$0xff]
      %v328 = vld [vmem:[#allocation2 + $0x8] sm:$0xff]
      %v329 = vld [vmem:[#allocation2 + $0x10] sm:$0xff]
      %v330 = vld [vmem:[#allocation2 + $0x18] sm:$0xff]
      %v331 = vpack.c.bf16 %v329, %v327
      %v332 = vpack.c.bf16 %v330, %v328
      %v333 = vld [vmem:[%s3] sm:$0xf]
      %v334 = vld [vmem:[%s3 + $0x4] sm:$0xf]
      %v335 = vld [vmem:[%s3 + $0x8] sm:$0xf]
      %v336 = vld [vmem:[%s3 + $0xc] sm:$0xf]
      %v337 = vld [vmem:[%s3 + $0x10] sm:$0xf]
      %v338 = vld [vmem:[%s3 + $0x14] sm:$0xf]
      %v339 = vld [vmem:[%s3 + $0x18] sm:$0xf]
      %v340 = vld [vmem:[%s3 + $0x1c] sm:$0xf]
      %v341 = vld [vmem:[%s3 + $0x20] sm:$0xf]
      %v342 = vld [vmem:[%s3 + $0x24] sm:$0xf]
      %v343 = vld [vmem:[%s3 + $0x28] sm:$0xf]
      %v344 = vld [vmem:[%s3 + $0x2c] sm:$0xf]
      %v345 = vld [vmem:[%s3 + $0x30] sm:$0xf]
      %v346 = vld [vmem:[%s3 + $0x34] sm:$0xf]
      %v347 = vld [vmem:[%s3 + $0x38] sm:$0xf]
      %v348 = vld [vmem:[%s3 + $0x3c] sm:$0xf]
      %v349 = vld [vmem:[%s3 + $0x40] sm:$0xf]
      %v350 = vld [vmem:[%s3 + $0x44] sm:$0xf]
      %v351 = vld [vmem:[#allocation2] sm:$0xfe]
      %v352 = vld [vmem:[#allocation2 + $0x8] sm:$0xfe]
      %v353 = vld [vmem:[#allocation2 + $0x20] sm:$0x1]
      %v354 = vld [vmem:[#allocation2 + $0x28] sm:$0x1]
      %v355 = vpack.c.bf16 %v329, %v351
      %v356 = vpack.c.bf16 %v330, %v352
      %v357 = vpack.c.bf16 %v353, %v353
      %v358 = vpack.c.bf16 %v354, %v354
      %s359 = scalar_lea.vmem %s3, 72
      %v360 = vld [vmem:[%s359] sm:$0xf]
      %v361 = vld [vmem:[%s359 + $0x4] sm:$0xf]
      %v362 = vld [vmem:[%s359 + $0x8] sm:$0xf]
      %v363 = vld [vmem:[%s359 + $0xc] sm:$0xf]
      %v364 = vld [vmem:[%s359 + $0x10] sm:$0xf]
      %v365 = vld [vmem:[%s359 + $0x14] sm:$0xf]
      %v366 = vld [vmem:[%s359 + $0x18] sm:$0xf]
      %v367 = vld [vmem:[%s359 + $0x1c] sm:$0xf]
      %v368 = vld [vmem:[%s359 + $0x20] sm:$0xf]
      %v369 = vld [vmem:[%s359 + $0x24] sm:$0xf]
      %v370 = vld [vmem:[%s359 + $0x28] sm:$0xf]
      %v371 = vld [vmem:[%s359 + $0x2c] sm:$0xf]
      %v372 = vld [vmem:[%s359 + $0x30] sm:$0xf]
      %v373 = vld [vmem:[%s359 + $0x34] sm:$0xf]
      %v374 = vld [vmem:[%s359 + $0x38] sm:$0xf]
      %v375 = vld [vmem:[%s359 + $0x3c] sm:$0xf]
      %v376 = vld [vmem:[%s359 + $0x40] sm:$0xf]
      %v377 = vld [vmem:[%s359 + $0x44] sm:$0xf]
      %vm378 = vsmask.f32 7424
      %v380 = vshrl.u32 %v355, 16
      %v382 = vshll.u32 %v355, 16
      %v384 = vrot.slane %v382, 1
      %v385 = vor.u32 %v380, %v384
      %v387 = vshll.u32 %v357, 16
      %v389 = vrot.slane %v387, 1
      %v390 = vsel %vm378, %v385, %v389
      %v392 = vshrl.u32 %v356, 16
      %v394 = vshll.u32 %v356, 16
      %v396 = vrot.slane %v394, 1
      %v397 = vor.u32 %v392, %v396
      %v399 = vshll.u32 %v358, 16
      %v401 = vrot.slane %v399, 1
      %v402 = vsel %vm378, %v397, %v401
      %v422 = vunpack.c.l.b16 %v360
      %v423 = vunpack.c.l.b16 %v361
      %v424 = vunpack.c.l.b16 %v362
      %v425 = vunpack.c.l.b16 %v363
      %v426 = vunpack.c.l.b16 %v364
      %v427 = vunpack.c.l.b16 %v365
      %v428 = vunpack.c.l.b16 %v366
      %v429 = vunpack.c.l.b16 %v367
      %v430 = vunpack.c.l.b16 %v368
      %v431 = vunpack.c.l.b16 %v369
      %v432 = vunpack.c.l.b16 %v370
      %v433 = vunpack.c.l.b16 %v371
      %v434 = vunpack.c.l.b16 %v372
      %v435 = vunpack.c.l.b16 %v373
      %v436 = vunpack.c.l.b16 %v374
      %v437 = vunpack.c.l.b16 %v375
      %v438 = vunpack.c.l.b16 %v376
      %v439 = vunpack.c.l.b16 %v377
      %v440 = vpack.c.b16 %v423, %v422
      %v441 = vpack.c.b16 %v425, %v424
      %v442 = vpack.c.b16 %v427, %v426
      %v443 = vpack.c.b16 %v429, %v428
      %v444 = vpack.c.b16 %v431, %v430
      %v445 = vpack.c.b16 %v433, %v432
      %v446 = vpack.c.b16 %v435, %v434
      %v447 = vpack.c.b16 %v437, %v436
      %v448 = vpack.c.b16 %v439, %v438
      %v459 = vsel %vm293, %v402, 0
      %461 = vmatprep.subr.bf16.mxu0 0
      %462 = vmatpush1.bf16.msra.mxu0 %v440
      %463 = vmatprep.subr.bf16.mxu0 0
      %464 = vmatpush1.bf16.msra.mxu0 %v441
      %465 = vmatprep.subr.bf16.mxu0 0
      %466 = vmatpush1.bf16.msra.mxu0 %v442
      %467 = vmatprep.subr.bf16.mxu0 0
      %468 = vmatpush1.bf16.msra.mxu0 %v443
      %469 = vmatprep.subr.bf16.mxu0 0
      %470 = vmatpush1.bf16.msra.mxu0 %v444
      %471 = vmatprep.subr.bf16.mxu0 0
      %472 = vmatpush1.bf16.msra.mxu0 %v445
      %473 = vmatprep.subr.bf16.mxu0 0
      %474 = vmatpush1.bf16.msra.mxu0 %v446
      %475 = vmatprep.subr.bf16.mxu0 0
      %476 = vmatpush1.bf16.msra.mxu0 %v447
      %477 = vmatprep.subr.bf16.mxu0 0
      %478 = vmatpush1.bf16.msra.mxu0 %v448
      %479 = vmatprep.subr.bf16.mxu0 0
      %480 = vmatpush1.bf16.msra.mxu0 0
      %481 = vmatprep.subr.bf16.mxu0 0
      %482 = vmatpush1.bf16.msra.mxu0 0
      %483 = vmatprep.subr.bf16.mxu0 0
      %484 = vmatpush1.bf16.msra.mxu0 0
      %485 = vmatprep.subr.bf16.mxu0 0
      %486 = vmatpush1.bf16.msra.mxu0 0
      %487 = vmatprep.subr.bf16.mxu0 0
      %488 = vmatpush1.bf16.msra.mxu0 0
      %489 = vmatprep.subr.bf16.mxu0 0
      %490 = vmatpush1.bf16.msra.mxu0 0
      %491 = vmatprep.subr.bf16.mxu0 0
      %492 = vmatpush1.bf16.msra.mxu0 0
      %493 = vmatprep.mubr.bf16.mxu0 %v459
      %494 = vmatmul.mubr.bf16.gmra.mrb[0].mxu0 %v390
      %v495 = vpop.f32.mrb[0].mxu0
      %v496 = vadd.f32 0.0, %v495
      %v497 = vpop.f32.mrb[0].mxu0
      %v498 = vpop.f32.mrb[0].mxu0
      %v499 = vadd.f32 0.0, %v498
      %v500 = vpop.f32.mrb[0].mxu0
      %501 = vdwg.mxu0
      %v520 = vunpack.c.l.b16 %v333
      %v521 = vunpack.c.l.b16 %v334
      %v522 = vunpack.c.l.b16 %v335
      %v523 = vunpack.c.l.b16 %v336
      %v524 = vunpack.c.l.b16 %v337
      %v525 = vunpack.c.l.b16 %v338
      %v526 = vunpack.c.l.b16 %v339
      %v527 = vunpack.c.l.b16 %v340
      %v528 = vunpack.c.l.b16 %v341
      %v529 = vunpack.c.l.b16 %v342
      %v530 = vunpack.c.l.b16 %v343
      %v531 = vunpack.c.l.b16 %v344
      %v532 = vunpack.c.l.b16 %v345
      %v533 = vunpack.c.l.b16 %v346
      %v534 = vunpack.c.l.b16 %v347
      %v535 = vunpack.c.l.b16 %v348
      %v536 = vunpack.c.l.b16 %v349
      %v537 = vunpack.c.l.b16 %v350
      %v538 = vpack.c.b16 %v521, %v520
      %v539 = vpack.c.b16 %v523, %v522
      %v540 = vpack.c.b16 %v525, %v524
      %v541 = vpack.c.b16 %v527, %v526
      %v542 = vpack.c.b16 %v529, %v528
      %v543 = vpack.c.b16 %v531, %v530
      %v544 = vpack.c.b16 %v533, %v532
      %v545 = vpack.c.b16 %v535, %v534
      %v546 = vpack.c.b16 %v537, %v536
      %v557 = vsel %vm293, %v332, 0
      %559 = vmatprep.subr.bf16.mxu0 0
      %560 = vmatpush1.bf16.msra.mxu0 %v538
      %561 = vmatprep.subr.bf16.mxu0 0
      %562 = vmatpush1.bf16.msra.mxu0 %v539
      %563 = vmatprep.subr.bf16.mxu0 0
      %564 = vmatpush1.bf16.msra.mxu0 %v540
      %565 = vmatprep.subr.bf16.mxu0 0
      %566 = vmatpush1.bf16.msra.mxu0 %v541
      %567 = vmatprep.subr.bf16.mxu0 0
      %568 = vmatpush1.bf16.msra.mxu0 %v542
      %569 = vmatprep.subr.bf16.mxu0 0
      %570 = vmatpush1.bf16.msra.mxu0 %v543
      %571 = vmatprep.subr.bf16.mxu0 0
      %572 = vmatpush1.bf16.msra.mxu0 %v544
      %573 = vmatprep.subr.bf16.mxu0 0
      %574 = vmatpush1.bf16.msra.mxu0 %v545
      %575 = vmatprep.subr.bf16.mxu0 0
      %576 = vmatpush1.bf16.msra.mxu0 %v546
      %577 = vmatprep.subr.bf16.mxu0 0
      %578 = vmatpush1.bf16.msra.mxu0 0
      %579 = vmatprep.subr.bf16.mxu0 0
      %580 = vmatpush1.bf16.msra.mxu0 0
      %581 = vmatprep.subr.bf16.mxu0 0
      %582 = vmatpush1.bf16.msra.mxu0 0
      %583 = vmatprep.subr.bf16.mxu0 0
      %584 = vmatpush1.bf16.msra.mxu0 0
      %585 = vmatprep.subr.bf16.mxu0 0
      %586 = vmatpush1.bf16.msra.mxu0 0
      %587 = vmatprep.subr.bf16.mxu0 0
      %588 = vmatpush1.bf16.msra.mxu0 0
      %589 = vmatprep.subr.bf16.mxu0 0
      %590 = vmatpush1.bf16.msra.mxu0 0
      %591 = vmatprep.mubr.bf16.mxu0 %v557
      %592 = vmatmul.mubr.bf16.gmra.mrb[0].mxu0 %v331
      %v593 = vpop.f32.mrb[0].mxu0
      %v594 = vadd.f32 %v496, %v593
      %v595 = vpop.f32.mrb[0].mxu0
      %v596 = vpop.f32.mrb[0].mxu0
      %v597 = vadd.f32 %v499, %v596
      %v598 = vpop.f32.mrb[0].mxu0
      %599 = vdwg.mxu0
      %v600 = vld [vmem:[#allocation2] sm:$0xfc]
      %v601 = vld [vmem:[#allocation2 + $0x8] sm:$0xfc]
      %v602 = vld [vmem:[#allocation2 + $0x20] sm:$0x3]
      %v603 = vld [vmem:[#allocation2 + $0x28] sm:$0x3]
      %v604 = vpack.c.bf16 %v329, %v600
      %v605 = vpack.c.bf16 %v330, %v601
      %v606 = vpack.c.bf16 %v602, %v602
      %v607 = vpack.c.bf16 %v603, %v603
      %s608 = scalar_lea.vmem %s3, 144
      %v609 = vld [vmem:[%s608] sm:$0xf]
      %v610 = vld [vmem:[%s608 + $0x4] sm:$0xf]
      %v611 = vld [vmem:[%s608 + $0x8] sm:$0xf]
      %v612 = vld [vmem:[%s608 + $0xc] sm:$0xf]
      %v613 = vld [vmem:[%s608 + $0x10] sm:$0xf]
      %v614 = vld [vmem:[%s608 + $0x14] sm:$0xf]
      %v615 = vld [vmem:[%s608 + $0x18] sm:$0xf]
      %v616 = vld [vmem:[%s608 + $0x1c] sm:$0xf]
      %v617 = vld [vmem:[%s608 + $0x20] sm:$0xf]
      %v618 = vld [vmem:[%s608 + $0x24] sm:$0xf]
      %v619 = vld [vmem:[%s608 + $0x28] sm:$0xf]
      %v620 = vld [vmem:[%s608 + $0x2c] sm:$0xf]
      %v621 = vld [vmem:[%s608 + $0x30] sm:$0xf]
      %v622 = vld [vmem:[%s608 + $0x34] sm:$0xf]
      %v623 = vld [vmem:[%s608 + $0x38] sm:$0xf]
      %v624 = vld [vmem:[%s608 + $0x3c] sm:$0xf]
      %v625 = vld [vmem:[%s608 + $0x40] sm:$0xf]
      %v626 = vld [vmem:[%s608 + $0x44] sm:$0xf]
      %vm631 = vcmask 1046528
      %v632 = vrot.slane %v604, 1
      %v633 = vrot.slane %v606, 1
      %v634 = vsel %vm631, %v632, %v633
      %v635 = vrot.slane %v605, 1
      %v636 = vrot.slane %v607, 1
      %v637 = vsel %vm631, %v635, %v636
      %v657 = vunpack.c.l.b16 %v609
      %v658 = vunpack.c.l.b16 %v610
      %v659 = vunpack.c.l.b16 %v611
      %v660 = vunpack.c.l.b16 %v612
      %v661 = vunpack.c.l.b16 %v613
      %v662 = vunpack.c.l.b16 %v614
      %v663 = vunpack.c.l.b16 %v615
      %v664 = vunpack.c.l.b16 %v616
      %v665 = vunpack.c.l.b16 %v617
      %v666 = vunpack.c.l.b16 %v618
      %v667 = vunpack.c.l.b16 %v619
      %v668 = vunpack.c.l.b16 %v620
      %v669 = vunpack.c.l.b16 %v621
      %v670 = vunpack.c.l.b16 %v622
      %v671 = vunpack.c.l.b16 %v623
      %v672 = vunpack.c.l.b16 %v624
      %v673 = vunpack.c.l.b16 %v625
      %v674 = vunpack.c.l.b16 %v626
      %v675 = vpack.c.b16 %v658, %v657
      %v676 = vpack.c.b16 %v660, %v659
      %v677 = vpack.c.b16 %v662, %v661
      %v678 = vpack.c.b16 %v664, %v663
      %v679 = vpack.c.b16 %v666, %v665
      %v680 = vpack.c.b16 %v668, %v667
      %v681 = vpack.c.b16 %v670, %v669
      %v682 = vpack.c.b16 %v672, %v671
      %v683 = vpack.c.b16 %v674, %v673
      %v694 = vsel %vm293, %v637, 0
      %696 = vmatprep.subr.bf16.mxu0 0
      %697 = vmatpush1.bf16.msra.mxu0 %v675
      %698 = vmatprep.subr.bf16.mxu0 0
      %699 = vmatpush1.bf16.msra.mxu0 %v676
      %700 = vmatprep.subr.bf16.mxu0 0
      %701 = vmatpush1.bf16.msra.mxu0 %v677
      %702 = vmatprep.subr.bf16.mxu0 0
      %703 = vmatpush1.bf16.msra.mxu0 %v678
      %704 = vmatprep.subr.bf16.mxu0 0
      %705 = vmatpush1.bf16.msra.mxu0 %v679
      %706 = vmatprep.subr.bf16.mxu0 0
      %707 = vmatpush1.bf16.msra.mxu0 %v680
      %708 = vmatprep.subr.bf16.mxu0 0
      %709 = vmatpush1.bf16.msra.mxu0 %v681
      %710 = vmatprep.subr.bf16.mxu0 0
      %711 = vmatpush1.bf16.msra.mxu0 %v682
      %712 = vmatprep.subr.bf16.mxu0 0
      %713 = vmatpush1.bf16.msra.mxu0 %v683
      %714 = vmatprep.subr.bf16.mxu0 0
      %715 = vmatpush1.bf16.msra.mxu0 0
      %716 = vmatprep.subr.bf16.mxu0 0
      %717 = vmatpush1.bf16.msra.mxu0 0
      %718 = vmatprep.subr.bf16.mxu0 0
      %719 = vmatpush1.bf16.msra.mxu0 0
      %720 = vmatprep.subr.bf16.mxu0 0
      %721 = vmatpush1.bf16.msra.mxu0 0
      %722 = vmatprep.subr.bf16.mxu0 0
      %723 = vmatpush1.bf16.msra.mxu0 0
      %724 = vmatprep.subr.bf16.mxu0 0
      %725 = vmatpush1.bf16.msra.mxu0 0
      %726 = vmatprep.subr.bf16.mxu0 0
      %727 = vmatpush1.bf16.msra.mxu0 0
      %728 = vmatprep.mubr.bf16.mxu0 %v694
      %729 = vmatmul.mubr.bf16.gmra.mrb[0].mxu0 %v634
      %v730 = vpop.f32.mrb[0].mxu0
      %v731 = vadd.f32 0.0, %v730
      %v732 = vpop.f32.mrb[0].mxu0
      %v733 = vpop.f32.mrb[0].mxu0
      %v734 = vadd.f32 0.0, %v733
      %v735 = vpop.f32.mrb[0].mxu0
      %736 = vdwg.mxu0
      %v737 = vadd.f32 %v594, %v731
      %v738 = vadd.f32 %v597, %v734
      %v739 = vadd.f32 %v737, %v738
      %v740 = vrot.slane %v739, 4
      %v741 = vadd.f32 %v739, %v740
      %v742 = vrot.slane %v741, 2
      %v743 = vadd.f32 %v741, %v742
      %v744 = vrot.slane %v743, 1
      %v745 = vadd.f32 %v743, %v744
      %746 = vst [vmem:[%s265] sm:$0x1] %v745
      %v747 = vmul.f32 %v737, %v737
      %v748 = vmul.f32 %v738, %v738
      %v749 = vadd.f32 %v747, %v748
      %v750 = vrot.slane %v749, 4
      %v751 = vadd.f32 %v749, %v750
      %v752 = vrot.slane %v751, 2
      %v753 = vadd.f32 %v751, %v752
      %v754 = vrot.slane %v753, 1
      %v755 = vadd.f32 %v753, %v754
      %756 = vst [vmem:[%s268] sm:$0x1] %v755
      %757 = vst [vmem:[%s262] sm:$0xff] %v737
      %758 = vst [vmem:[%s262 + $0x8] sm:$0xff] %v738
      %p759 = scmp.lt.s32.totalorder %s18, 1
      %s760 = scalar_select %p759, %s18, 1
      %s761 = smul.addr %s760, 2
      %s762 = smul.addr %s761, 8
      %s763 = scalar_lea.vmem %s4, %s762
      %p764 = scmp.lt.s32.totalorder %s18, 1
      %s765 = scalar_select %p764, %s18, 1
      %s766 = scalar_lea.vmem %s5, %s765
      %p767 = scmp.lt.s32.totalorder %s18, 1
      %s768 = scalar_select %p767, %s18, 1
      %s769 = scalar_lea.vmem %s6, %s768
      // Predicated region
      $region37: #{in_conv_forward.4} parent=35 // pred_check
        %p770 = pneg %p125
      $region38: #{in_conv_forward.4} parent=35 // pred_check_branch
        %772 = sbr.rel (%p770) target = $region40
      $region39: #{in_conv_forward.4} parent=35 // pred_region
        _
      $region40: #{in_conv_forward.4} parent=35 // pred_fallthru
        _
      // Predicated region
      $region41: #{in_conv_forward.4} parent=35 // pred_check
        %p773 = pneg %p151
      $region42: #{in_conv_forward.4} parent=35 // pred_check_branch
        %775 = sbr.rel (%p773) target = $region44
      $region43: #{in_conv_forward.4} parent=35 // pred_region
        _
      $region44: #{in_conv_forward.4} parent=35 // pred_fallthru
        _
      // Predicated region
      $region45: #{in_conv_forward.4} parent=35 // pred_check
        %p776 = pneg %p177
      $region46: #{in_conv_forward.4} parent=35 // pred_check_branch
        %778 = sbr.rel (%p776) target = $region48
      $region47: #{in_conv_forward.4} parent=35 // pred_region
        _
      $region48: #{in_conv_forward.4} parent=35 // pred_fallthru
        _
    $region36: #{in_conv_forward.4} parent=5 // pred_fallthru
      _
    %p779 = scmp.le.s32.totalorder 2, %s13
    // Predicated region
    $region49: #{in_conv_forward.4} parent=5 // pred_check
      %p780 = pneg %p779
    $region50: #{in_conv_forward.4} parent=5 // pred_check_branch
      %782 = sbr.rel (%p780) target = $region52
    $region51: #{in_conv_forward.4} parent=5 // pred_region
      %s783 = ssub.s32 %s13, 2
      // Predicated region
      $region53: #{in_conv_forward.4} parent=51 // pred_check
        %p784 = pneg %p131
      $region54: #{in_conv_forward.4} parent=51 // pred_check_branch
        %786 = sbr.rel (%p784) target = $region56
      $region55: #{in_conv_forward.4} parent=51 // pred_region
        %p787 = scmp.lt.s32.totalorder %s19, 1
        %s788 = scalar_select %p787, %s19, 1
        %s789 = smul.addr %s788, 2
        %s790 = smul.addr %s789, 8
        %s791 = scalar_lea.vmem %s4, %s790
      $region56: #{in_conv_forward.4} parent=51 // pred_fallthru
        _
      // Predicated region
      $region57: #{in_conv_forward.4} parent=51 // pred_check
        %p792 = pneg %p157
      $region58: #{in_conv_forward.4} parent=51 // pred_check_branch
        %794 = sbr.rel (%p792) target = $region60
      $region59: #{in_conv_forward.4} parent=51 // pred_region
        %p795 = scmp.lt.s32.totalorder %s19, 1
        %s796 = scalar_select %p795, %s19, 1
        %s797 = scalar_lea.vmem %s5, %s796
      $region60: #{in_conv_forward.4} parent=51 // pred_fallthru
        _
      // Predicated region
      $region61: #{in_conv_forward.4} parent=51 // pred_check
        %p798 = pneg %p183
      $region62: #{in_conv_forward.4} parent=51 // pred_check_branch
        %800 = sbr.rel (%p798) target = $region64
      $region63: #{in_conv_forward.4} parent=51 // pred_region
        %p801 = scmp.lt.s32.totalorder %s19, 1
        %s802 = scalar_select %p801, %s19, 1
        %s803 = scalar_lea.vmem %s6, %s802
      $region64: #{in_conv_forward.4} parent=51 // pred_fallthru
        _
    $region52: #{in_conv_forward.4} parent=5 // pred_fallthru
      _
  $region6: #{in_conv_forward.4} parent=0 // loop_footer
    %s17 = sadd.s32 1, %s13
  $region7: #{in_conv_forward.4} parent=0 // loop_footer_branch
    %12 = sbr.rel target = $region3
  $region8: #{in_conv_forward.4} parent=0 // loop_exit
    _

// kernel: in_conv_forward.5
$region0: #{in_conv_forward.5}
  #allocation0 [shape = 'u32[]', space=smem, size = 0x4, offset = 0x4, fixed_abs, tag = 'smem constant byte address 0x4 - core index']
  #allocation1 [shape = 'u32[144,128]{1,0:T(1,128)}', space=vmem, size = 0x12000, scoped, tag = 'internal scratch']
  %s0 = inlined_call_operand.vmem [shape: f32[2,16,128], index: 0, kind: input, shape index: {}]
  %s1 = inlined_call_operand.vmem [shape: f32[1,128], index: 1, kind: input, shape index: {}]
  %s2 = inlined_call_operand.vmem [shape: f32[1,128], index: 2, kind: input, shape index: {}]
  %s3 = inlined_call_operand.vmem [shape: f32[2,16,128], index: 3, kind: output, shape index: {}]
  %s4 = sld [smem:[#allocation0]]
  $region45: #{in_conv_forward.5} parent=0
    _
  %s6 = ssub.s32 1, %s4
  %s7 = scalar_select 0, %s6, %s4
  loop: start=0, step=1, limit=4
  $region2: #{in_conv_forward.5} parent=0 // loop_pre_header
    _
  $region3: #{in_conv_forward.5} parent=0 // loop_header
    %s9 = sphi 0, %s13
    %p10 = scmp.ge.s32.totalorder %s9, 4
    %s19 = sphi 0, %s21
    %s22 = sphi 0, %s19
    %s23 = sphi 0, %s22
    %s39 = sphi 0, %s23
    %s43 = sphi 0, %s43
    %s45 = sphi 0, %s43
    %s46 = sphi 0, %s45
    %s60 = sphi 0, %s46
    %s64 = sphi 0, %s64
    %s66 = sphi 0, %s64
    %s67 = sphi 0, %s66
    %s81 = sphi 0, %s67
    %s87 = sphi 0, %s89
    %s90 = sphi 0, %s87
    %s91 = sphi 0, %s90
    %s107 = sphi 0, %s91
  $region4: #{in_conv_forward.5} parent=0 // loop_header_branch
    %12 = sbr.rel (%p10) target = $region8
  $region5: #{in_conv_forward.5} parent=0 // loop_body
    %s14 = ssub.s32 %s9, 1
    %s15 = ssub.s32 %s9, 2
    %s16 = sadd.s32 %s9, 1
    %s17 = ssub.s32 %s9, %s16
    %p18 = scmp.eq.s32.totalorder %s17, 0
    %s20 = sadd.s32 %s19, 1
    %s21 = scalar_select %p18, %s19, %s20
    %p24 = pneg %p18
    %p25 = scmp.eq.s32.totalorder %s9, 1
    %p26 = por %p24, %p25
    %p27 = scmp.ne.s32.totalorder %s19, %s22
    %p28 = scmp.eq.s32.totalorder %s9, 0
    %p29 = por %p27, %p28
    %p30 = scmp.ne.s32.totalorder %s19, %s22
    %p31 = scmp.eq.s32.totalorder %s14, 1
    %p32 = por %p30, %p31
    %p33 = scmp.ne.s32.totalorder %s22, %s23
    %p34 = scmp.eq.s32.totalorder %s14, 0
    %p35 = por %p33, %p34
    %p36 = scmp.ne.s32.totalorder %s22, %s23
    %p37 = scmp.eq.s32.totalorder %s15, 1
    %p38 = por %p36, %p37
    %p40 = scmp.ne.s32.totalorder %s23, %s39
    %p41 = scmp.eq.s32.totalorder %s15, 0
    %p42 = por %p40, %p41
    %s44 = sadd.s32 %s43, 1
    %p47 = scmp.eq.s32.totalorder %s9, 1
    %p48 = scmp.ne.s32.totalorder %s43, %s45
    %p49 = scmp.eq.s32.totalorder %s9, 0
    %p50 = por %p48, %p49
    %p51 = scmp.ne.s32.totalorder %s43, %s45
    %p52 = scmp.eq.s32.totalorder %s14, 1
    %p53 = por %p51, %p52
    %p54 = scmp.ne.s32.totalorder %s45, %s46
    %p55 = scmp.eq.s32.totalorder %s14, 0
    %p56 = por %p54, %p55
    %p57 = scmp.ne.s32.totalorder %s45, %s46
    %p58 = scmp.eq.s32.totalorder %s15, 1
    %p59 = por %p57, %p58
    %p61 = scmp.ne.s32.totalorder %s46, %s60
    %p62 = scmp.eq.s32.totalorder %s15, 0
    %p63 = por %p61, %p62
    %s65 = sadd.s32 %s64, 1
    %p68 = scmp.eq.s32.totalorder %s9, 1
    %p69 = scmp.ne.s32.totalorder %s64, %s66
    %p70 = scmp.eq.s32.totalorder %s9, 0
    %p71 = por %p69, %p70
    %p72 = scmp.ne.s32.totalorder %s64, %s66
    %p73 = scmp.eq.s32.totalorder %s14, 1
    %p74 = por %p72, %p73
    %p75 = scmp.ne.s32.totalorder %s66, %s67
    %p76 = scmp.eq.s32.totalorder %s14, 0
    %p77 = por %p75, %p76
    %p78 = scmp.ne.s32.totalorder %s66, %s67
    %p79 = scmp.eq.s32.totalorder %s15, 1
    %p80 = por %p78, %p79
    %p82 = scmp.ne.s32.totalorder %s67, %s81
    %p83 = scmp.eq.s32.totalorder %s15, 0
    %p84 = por %p82, %p83
    %s85 = ssub.s32 %s9, %s16
    %p86 = scmp.eq.s32.totalorder %s85, 0
    %s88 = sadd.s32 %s87, 1
    %s89 = scalar_select %p86, %s87, %s88
    %p92 = pneg %p86
    %p93 = scmp.eq.s32.totalorder %s9, 1
    %p94 = por %p92, %p93
    %p95 = scmp.ne.s32.totalorder %s87, %s90
    %p96 = scmp.eq.s32.totalorder %s9, 0
    %p97 = por %p95, %p96
    %p98 = scmp.ne.s32.totalorder %s87, %s90
    %p99 = scmp.eq.s32.totalorder %s14, 1
    %p100 = por %p98, %p99
    %p101 = scmp.ne.s32.totalorder %s90, %s91
    %p102 = scmp.eq.s32.totalorder %s14, 0
    %p103 = por %p101, %p102
    %p104 = scmp.ne.s32.totalorder %s90, %s91
    %p105 = scmp.eq.s32.totalorder %s15, 1
    %p106 = por %p104, %p105
    %p108 = scmp.ne.s32.totalorder %s91, %s107
    %p109 = scmp.eq.s32.totalorder %s15, 0
    %p110 = por %p108, %p109
    %p111 = scmp.le.s32.totalorder 1, %s9
    %p112 = scmp.lt.s32.totalorder %s9, 3
    %p113 = pnand %p111, %p112
    %p114 = pneg %p113
    // Predicated region
    $region9: #{in_conv_forward.5} parent=5 // pred_check
      _
    $region10: #{in_conv_forward.5} parent=5 // pred_check_branch
      %116 = sbr.rel (%p113) target = $region12
    $region11: #{in_conv_forward.5} parent=5 // pred_region
      %s117 = ssub.s32 %s9, 1
      // Predicated region
      $region13: #{in_conv_forward.5} parent=11 // pred_check
        %p118 = pneg %p56
      $region14: #{in_conv_forward.5} parent=11 // pred_check_branch
        %120 = sbr.rel (%p118) target = $region16
      $region15: #{in_conv_forward.5} parent=11 // pred_region
        _
      $region16: #{in_conv_forward.5} parent=11 // pred_fallthru
        _
      // Predicated region
      $region17: #{in_conv_forward.5} parent=11 // pred_check
        %p121 = pneg %p77
      $region18: #{in_conv_forward.5} parent=11 // pred_check_branch
        %123 = sbr.rel (%p121) target = $region20
      $region19: #{in_conv_forward.5} parent=11 // pred_region
        _
      $region20: #{in_conv_forward.5} parent=11 // pred_fallthru
        _
    $region12: #{in_conv_forward.5} parent=5 // pred_fallthru
      _
    %p124 = scmp.lt.s32.totalorder %s9, 2
    // Predicated region
    $region21: #{in_conv_forward.5} parent=5 // pred_check
      %p125 = pneg %p124
    $region22: #{in_conv_forward.5} parent=5 // pred_check_branch
      %127 = sbr.rel (%p125) target = $region24
    $region23: #{in_conv_forward.5} parent=5 // pred_region
      // Predicated region
      $region25: #{in_conv_forward.5} parent=23 // pred_check
        %p128 = pneg %p29
      $region26: #{in_conv_forward.5} parent=23 // pred_check_branch
        %130 = sbr.rel (%p128) target = $region28
      $region27: #{in_conv_forward.5} parent=23 // pred_region
        %p131 = scmp.lt.s32.totalorder %s9, 1
        %s132 = scalar_select %p131, %s9, 1
        %s133 = smul.addr %s132, 2
        %s134 = smul.addr %s133, 8
        %s135 = scalar_lea.vmem %s0, %s134
      $region28: #{in_conv_forward.5} parent=23 // pred_fallthru
        _
    $region24: #{in_conv_forward.5} parent=5 // pred_fallthru
      _
    %p136 = scmp.le.s32.totalorder 1, %s9
    %p137 = scmp.lt.s32.totalorder %s9, 3
    %p138 = pnand %p136, %p137
    %p139 = pneg %p138
    // Predicated region
    $region29: #{in_conv_forward.5} parent=5 // pred_check
      _
    $region30: #{in_conv_forward.5} parent=5 // pred_check_branch
      %141 = sbr.rel (%p138) target = $region32
    $region31: #{in_conv_forward.5} parent=5 // pred_region
      %s142 = ssub.s32 %s9, 1
      %p143 = scmp.lt.s32.totalorder %s14, 1
      %s144 = scalar_select %p143, %s14, 1
      %s145 = smul.addr %s144, 2
      %s146 = smul.addr %s145, 8
      %s147 = scalar_lea.vmem %s0, %s146
      %p148 = pneg %p35
      %p149 = pneg %p32
      %p150 = pneg %p56
      %p151 = pneg %p53
      %p152 = pneg %p77
      %p153 = pneg %p74
      %p154 = pneg %p103
      %p155 = pneg %p100
      %p156 = scmp.lt.s32.totalorder %s14, 1
      %s157 = scalar_select %p156, %s14, 1
      %s158 = smul.addr %s157, 2
      %s159 = smul.addr %s158, 8
      %s160 = scalar_lea.vmem %s3, %s159
      %p161 = scmp.lt.s32.totalorder %s14, 1
      %s162 = scalar_select %p161, %s14, 1
      %s163 = smul.addr %s162, 2
      %s164 = smul.addr %s163, 8
      %s165 = scalar_lea.vmem %s0, %s164
      %p166 = scmp.lt.s32.totalorder %s14, 1
      %s167 = scalar_select %p166, %s14, 1
      %s168 = smul.addr %s167, 2
      %s169 = smul.addr %s168, 8
      %s170 = scalar_lea.vmem %s3, %s169
      %v171 = vld [vmem:[%s165] sm:$0xff]
      %v172 = vld [vmem:[%s165 + $0x8] sm:$0xff]
      %v173 = vld [vmem:[%s1] sm:$0x1]
      %v175 = vlaneseq
      %v176 = vshrl.u32 %v175, 7
      %v177 = vsub.s32 0, %v176
      %v178 = vrot.slane %v173, %v177
      %v180 = vmul.f32 %v171, %v178
      %v181 = vmul.f32 %v172, %v178
      %v182 = vld [vmem:[%s2] sm:$0x1]
      %v184 = vlaneseq
      %v185 = vshrl.u32 %v184, 7
      %v186 = vsub.s32 0, %v185
      %v187 = vrot.slane %v182, %v186
      %v189 = vadd.f32 %v180, %v187
      %v190 = vadd.f32 %v181, %v187
      %v191 = vmax.f32 %v189, 0.0
      %v192 = vmax.f32 %v190, 0.0
      %193 = vst [vmem:[%s170] sm:$0xff] %v191
      %194 = vst [vmem:[%s170 + $0x8] sm:$0xff] %v192
      %p195 = scmp.lt.s32.totalorder %s14, 1
      %s196 = scalar_select %p195, %s14, 1
      %s197 = smul.addr %s196, 2
      %s198 = smul.addr %s197, 8
      %s199 = scalar_lea.vmem %s3, %s198
      // Predicated region
      $region33: #{in_conv_forward.5} parent=31 // pred_check
        %p200 = pneg %p100
      $region34: #{in_conv_forward.5} parent=31 // pred_check_branch
        %202 = sbr.rel (%p200) target = $region36
      $region35: #{in_conv_forward.5} parent=31 // pred_region
        _
      $region36: #{in_conv_forward.5} parent=31 // pred_fallthru
        _
    $region32: #{in_conv_forward.5} parent=5 // pred_fallthru
      _
    %p203 = scmp.le.s32.totalorder 2, %s9
    // Predicated region
    $region37: #{in_conv_forward.5} parent=5 // pred_check
      %p204 = pneg %p203
    $region38: #{in_conv_forward.5} parent=5 // pred_check_branch
      %206 = sbr.rel (%p204) target = $region40
    $region39: #{in_conv_forward.5} parent=5 // pred_region
      %s207 = ssub.s32 %s9, 2
      // Predicated region
      $region41: #{in_conv_forward.5} parent=39 // pred_check
        %p208 = pneg %p106
      $region42: #{in_conv_forward.5} parent=39 // pred_check_branch
        %210 = sbr.rel (%p208) target = $region44
      $region43: #{in_conv_forward.5} parent=39 // pred_region
        %p211 = scmp.lt.s32.totalorder %s15, 1
        %s212 = scalar_select %p211, %s15, 1
        %s213 = smul.addr %s212, 2
        %s214 = smul.addr %s213, 8
        %s215 = scalar_lea.vmem %s3, %s214
      $region44: #{in_conv_forward.5} parent=39 // pred_fallthru
        _
    $region40: #{in_conv_forward.5} parent=5 // pred_fallthru
      _
  $region6: #{in_conv_forward.5} parent=0 // loop_footer
    %s13 = sadd.s32 1, %s9
  $region7: #{in_conv_forward.5} parent=0 // loop_footer_branch
    %8 = sbr.rel target = $region3
  $region8: #{in_conv_forward.5} parent=0 // loop_exit
    _

</llo_original>
